<compile_context>
chip_gen: v5e
topology: v5e:2x2
jax: 0.10.0
libtpu: 0.0.40
codegen_flags: <defaults>
</compile_context>

<pallas_src>
import functools

import jax
import jax.numpy as jnp
import numpy as np
from jax.experimental import pallas as pl
from jax.experimental.pallas import tpu as pltpu

TOKEN_SELF_ATTN_VALUE = -5e4  # same constant reformer_pytorch uses for q==k mask


# ----------------------------------------------------------------------------
# Pallas kernel: CB bucket chunks of one (batch*head) row per grid step
# ----------------------------------------------------------------------------
def _bucket_attn_kernel(qpos_ref, ppos_ref, q_ref, k_ref, kp_ref, v_ref, vp_ref,
                        o_ref, lse_ref, *, cb):
    # Block shapes (leading 1 = batch*head slot):
    #   q/k/v : (1, CB, W, dh) bf16      kp/vp: (1, 1, W, dh) bf16  (one-back chunk)
    #   qpos  : (1, CB, W, 1) int32      ppos : (1, 1, W, 1) int32
    q = q_ref[0]                        # (CB, W, dh)  already scaled by dh**-0.5
    k_cur = k_ref[0]                    # (CB, W, dh)  L2-normalized keys
    v_cur = v_ref[0]                    # (CB, W, dh)
    pos = qpos_ref[...][0, :, :, 0]     # (CB, W) int32 token positions
    pos_b = ppos_ref[...][0, :, :, 0]   # (1, W)  positions of the boundary chunk

    # Look-one-back built in VMEM: previous chunk of chunk i is chunk i-1 of
    # this block, except chunk 0 which uses the boundary chunk (wraps mod C).
    if cb > 1:
        k_prev = jnp.concatenate([kp_ref[0], k_cur[:-1]], axis=0)
        v_prev = jnp.concatenate([vp_ref[0], v_cur[:-1]], axis=0)
        pos_prev = jnp.concatenate([pos_b, pos[:-1]], axis=0)
    else:
        k_prev, v_prev, pos_prev = kp_ref[0], vp_ref[0], pos_b

    k = jnp.concatenate([k_cur, k_prev], axis=1)        # (CB, 2W, dh)
    v = jnp.concatenate([v_cur, v_prev], axis=1)        # (CB, 2W, dh)
    kpos = jnp.concatenate([pos, pos_prev], axis=1)     # (CB, 2W)

    # dots = q @ k^T (scale already folded into q), f32 accumulation on the MXU
    dots = jnp.einsum("cqd,ckd->cqk", q, k,
                      preferred_element_type=jnp.float32)           # (CB, W, 2W)

    # mask out attention to self (shared QK), exactly like masked_fill_(-5e4)
    self_mask = pos[:, :, None] == kpos[:, None, :]
    dots = jnp.where(self_mask, TOKEN_SELF_ATTN_VALUE, dots)

    # stable softmax with a single exp pass
    dmax = jnp.max(dots, axis=-1, keepdims=True)
    e = jnp.exp(dots - dmax)
    s = jnp.sum(e, axis=-1, keepdims=True)
    p = e * pl.reciprocal(s, approx=True)
    lse = dmax + jnp.log(s)

    o = jnp.einsum("cqk,ckd->cqd", p.astype(v.dtype), v,
                   preferred_element_type=jnp.float32)              # (CB, W, dh)
    o_ref[0] = o.astype(o_ref.dtype)
    lse_ref[0] = lse[..., 0]


def _choose_chunk_block(C, W, dh):
    """How many bucket chunks each grid step processes (must divide C)."""
    # live bytes per chunk per pipeline buffer: q/k/v bf16, o f32, pos i32, lse f32
    per_chunk = W * dh * (2 + 2 + 2 + 4) + W * 8
    try:
        vmem_bytes = pltpu.get_tpu_info().vmem_capacity_bytes
    except Exception:  # conservative fallback (v7x-sized VMEM)
        vmem_bytes = 64 * 1024 * 1024
    budget = vmem_bytes // 16            # headroom for double-buffering + scratch
    target = int(max(8, min(256, budget // max(per_chunk, 1))))
    if C <= target:
        return C
    for cb in range(target, 0, -1):
        # keep lse's (1, CB, W) block legal: CB multiple of 8 (or the full C)
        if C % cb == 0 and cb % 8 == 0:
            return cb
    return C


def bucket_attention(qpos, bq, bk, bv):
    """qpos: (BH, C, W) int32; bq/bk/bv: (BH, C, W, dh) bf16 (q pre-scaled).

    Returns o: (BH, C, W, dh) f32 and lse: (BH, C, W) f32.
    """
    BH, C, W, dh = bq.shape
    CB = _choose_chunk_block(C, W, dh)
    nblk = C // CB
    qpos4 = qpos[..., None].astype(jnp.int32)        # (BH, C, W, 1)

    cur4 = lambda b, j: (b, j, 0, 0)                               # block of CB chunks
    prev4 = lambda b, j: (b, (j * CB + C - 1) % C, 0, 0)           # one-back boundary
    cur3 = lambda b, j: (b, j, 0)

    kernel = functools.partial(_bucket_attn_kernel, cb=CB)
    return pl.pallas_call(
        kernel,
        out_shape=(
            jax.ShapeDtypeStruct((BH, C, W, dh), jnp.float32),
            jax.ShapeDtypeStruct((BH, C, W), jnp.float32),
        ),
        grid=(BH, nblk),
        in_specs=[
            pl.BlockSpec((1, CB, W, 1), cur4),     # positions of current chunks
            pl.BlockSpec((1, 1, W, 1), prev4),     # positions of boundary chunk
            pl.BlockSpec((1, CB, W, dh), cur4),    # q
            pl.BlockSpec((1, CB, W, dh), cur4),    # k (current chunks)
            pl.BlockSpec((1, 1, W, dh), prev4),    # k (one-back boundary chunk)
            pl.BlockSpec((1, CB, W, dh), cur4),    # v (current chunks)
            pl.BlockSpec((1, 1, W, dh), prev4),    # v (one-back boundary chunk)
        ],
        out_specs=(
            pl.BlockSpec((1, CB, W, dh), cur4),
            pl.BlockSpec((1, CB, W), cur3),
        ),
        compiler_params=pltpu.CompilerParams(
            dimension_semantics=("parallel", "parallel"),
            vmem_limit_bytes=64 * 1024 * 1024,
        ),
    )(qpos4, qpos4, bq, bk, bk, bv, bv)


# ----------------------------------------------------------------------------
# JAX glue reproducing reformer LSHAttention semantics
# ----------------------------------------------------------------------------
def _hash_vectors(qk, n_buckets, n_hashes, rot_key):
    """qk: (bh, seqlen, dh) -> buckets (bh, n_hashes*seqlen)."""
    bh, seqlen, dh = qk.shape
    assert n_buckets % 2 == 0
    # shared random rotations across batch*heads (random_rotations_per_head=False)
    rotations = jax.random.normal(
        rot_key, (1, dh, n_hashes, n_buckets // 2), jnp.float32
    )
    rotations = jnp.broadcast_to(rotations, (bh, dh, n_hashes, n_buckets // 2))
    rotated = jnp.einsum("btf,bfhi->bhti", qk, rotations)
    rotated = jnp.concatenate([rotated, -rotated], axis=-1)
    buckets = jnp.argmax(rotated, axis=-1).astype(jnp.int32)  # (bh, n_hashes, seqlen)
    offsets = (jnp.arange(n_hashes, dtype=jnp.int32) * n_buckets).reshape(1, -1, 1)
    return (buckets + offsets).reshape(bh, -1)


def lsh_attention(qk, v, *, bucket_size, n_hashes, rot_key):
    """qk, v: (b*heads, seqlen, dh).  Returns (b*heads, seqlen, dh)."""
    bh, seqlen, dh = qk.shape
    assert seqlen % (bucket_size * 2) == 0
    n_buckets = seqlen // bucket_size

    buckets = _hash_vectors(qk, n_buckets, n_hashes, rot_key)
    total = n_hashes * seqlen

    ticker = jnp.broadcast_to(jnp.arange(total, dtype=jnp.int32), (bh, total))
    buckets_and_t = seqlen * buckets + (ticker % seqlen)

    # sort positions by (bucket, position); keys are unique so ordering is exact
    sticker = jnp.argsort(buckets_and_t, axis=-1).astype(jnp.int32)
    undo_sort = jnp.argsort(sticker, axis=-1).astype(jnp.int32)

    st = (sticker % seqlen).astype(jnp.int32)
    sqk = jnp.take_along_axis(qk, st[:, :, None], axis=1)
    sv = jnp.take_along_axis(v, st[:, :, None], axis=1)

    C = n_hashes * n_buckets
    W = total // C  # == bucket_size

    qpos = st.reshape(bh, C, W)
    sqk = sqk.reshape(bh, C, W, dh)
    sv = sv.reshape(bh, C, W, dh)

    # fold softmax scale into q; F.normalize(p=2, dim=-1, eps=1e-12) on keys
    scale = float(dh) ** -0.5
    bq = (sqk * scale).astype(jnp.bfloat16)
    knorm = jnp.sqrt(jnp.sum(sqk * sqk, axis=-1, keepdims=True))
    bk = (sqk / jnp.maximum(knorm, 1e-12)).astype(jnp.bfloat16)
    bv = sv.astype(jnp.bfloat16)

    bo, slogits = bucket_attention(qpos, bq, bk, bv)

    so = bo.reshape(bh, total, dh)
    slog = slogits.reshape(bh, total)

    # unsort
    o = jnp.take_along_axis(so, undo_sort[:, :, None], axis=1)
    logits = jnp.take_along_axis(slog, undo_sort, axis=1)

    o = o.reshape(bh, n_hashes, seqlen, dh)
    logits = logits.reshape(bh, n_hashes, seqlen, 1)

    # combine hash rounds
    probs = jnp.exp(logits - jax.nn.logsumexp(logits, axis=1, keepdims=True))
    return jnp.sum(o * probs, axis=1)


# ----------------------------------------------------------------------------
# Full module forward (matches LshSelfAttention.forward)
# ----------------------------------------------------------------------------
def init_params(key, d_hidden):
    k1, k2, k3 = jax.random.split(key, 3)
    s = 1.0 / float(np.sqrt(d_hidden))
    return {
        "w_qk": jax.random.normal(k1, (d_hidden, d_hidden), jnp.float32) * s,
        "w_v": jax.random.normal(k2, (d_hidden, d_hidden), jnp.float32) * s,
        "w_out": jax.random.normal(k3, (d_hidden, d_hidden), jnp.float32) * s,
        "b_out": jnp.zeros((d_hidden,), jnp.float32),
    }


def lsh_self_attention_forward(x, params, *, n_heads, bucket_size, n_hashes, rot_key):
    b, l, d = x.shape
    assert d % n_heads == 0
    dh = d // n_heads

    # pad to a multiple of 2*bucket_size (always pads, matching the PyTorch code)
    padding = 2 * bucket_size - l % (2 * bucket_size)
    x_p = jnp.concatenate([x, jnp.zeros((b, padding, d), x.dtype)], axis=1)
    t = x_p.shape[1]

    qk = x_p @ params["w_qk"].T
    v = x_p @ params["w_v"].T

    def merge_heads(z):  # (b, t, d) -> (b*h, t, dh)
        return z.reshape(b, t, n_heads, dh).transpose(0, 2, 1, 3).reshape(b * n_heads, t, dh)

    out = lsh_attention(
        merge_heads(qk), merge_heads(v),
        bucket_size=bucket_size, n_hashes=n_hashes, rot_key=rot_key,
    )  # (b*h, t, dh)

    out = out.reshape(b, n_heads, t, dh).transpose(0, 2, 1, 3).reshape(b, t, d)
    out = out @ params["w_out"].T + params["b_out"]

    # TODO(synk): dropout layers (p_dropout / post_attn_dropout) are identity at
    # eval time and are omitted.
    return out[:, :-padding, :]


# pure-JAX reference for the Pallas bucket-attention hot path (sanity check)
def _bucket_attention_ref(qpos, bq, bk, bv):
    bqf = bq.astype(jnp.float32)
    bkf = bk.astype(jnp.float32)
    bvf = bv.astype(jnp.float32)

    def look_one_back(x):
        x_extra = jnp.concatenate([x[:, -1:], x[:, :-1]], axis=1)
        return jnp.concatenate([x, x_extra], axis=2)

    k = look_one_back(bkf)
    v = look_one_back(bvf)
    kpos = look_one_back(qpos)

    dots = jnp.einsum("bcqd,bckd->bcqk", bqf, k)
    mask = qpos[:, :, :, None] == kpos[:, :, None, :]
    dots = jnp.where(mask, TOKEN_SELF_ATTN_VALUE, dots)
    lse = jax.nn.logsumexp(dots, axis=-1, keepdims=True)
    p = jnp.exp(dots - lse)
    o = jnp.einsum("bcqk,bckd->bcqd", p, v)
    return o, lse[..., 0]


if __name__ == "__main__":
    d_hidden, n_heads = 32, 4
    bucket_size, n_hashes = 8, 2
    b, l = 2, 8

    key = jax.random.PRNGKey(0)
    kp, kx, kr, ks = jax.random.split(key, 4)

    params = init_params(kp, d_hidden)
    x = jax.random.normal(kx, (b, l, d_hidden), jnp.float32)

    # quick kernel-vs-reference sanity check on the hot path
    BH, C, W, dh = 2, 4, 8, 8
    k1, k2, k3, k4 = jax.random.split(ks, 4)
    tq = (jax.random.normal(k1, (BH, C, W, dh), jnp.float32) * dh ** -0.5
          ).astype(jnp.bfloat16)
    traw = jax.random.normal(k2, (BH, C, W, dh), jnp.float32)
    tk = (traw / jnp.maximum(jnp.linalg.norm(traw, axis=-1, keepdims=True), 1e-12)
          ).astype(jnp.bfloat16)
    tv = jax.random.normal(k3, (BH, C, W, dh), jnp.float32).astype(jnp.bfloat16)
    tpos = jax.random.randint(k4, (BH, C, W), 0, 16, dtype=jnp.int32)

    o_k, l_k = bucket_attention(tpos, tq, tk, tv)
    o_r, l_r = _bucket_attention_ref(tpos, tq, tk, tv)
    np.testing.assert_allclose(np.asarray(o_k), np.asarray(o_r), atol=3e-2, rtol=3e-2)
    np.testing.assert_allclose(np.asarray(l_k), np.asarray(l_r), atol=3e-2, rtol=3e-2)

    y = lsh_self_attention_forward(
        x, params,
        n_heads=n_heads, bucket_size=bucket_size, n_hashes=n_hashes, rot_key=kr,
    )
    jax.block_until_ready(y)
    assert y.shape == (b, l, d_hidden), y.shape
    assert bool(jnp.all(jnp.isfinite(y)))
    print("KERNEL_OK")
</pallas_src>

<mosaic_0001>
module attributes {stable_mosaic.version = 11 : i64} {
  func.func @_bucket_attn_kernel(%arg0: i32, %arg1: i32, %arg2: memref<1x4x8x1xi32, #tpu.memory_space<vmem>>, %arg3: memref<1x1x8x1xi32, #tpu.memory_space<vmem>>, %arg4: memref<1x4x8x8xbf16, #tpu.memory_space<vmem>>, %arg5: memref<1x4x8x8xbf16, #tpu.memory_space<vmem>>, %arg6: memref<1x1x8x8xbf16, #tpu.memory_space<vmem>>, %arg7: memref<1x4x8x8xbf16, #tpu.memory_space<vmem>>, %arg8: memref<1x1x8x8xbf16, #tpu.memory_space<vmem>>, %arg9: memref<1x4x8x8xf32, #tpu.memory_space<vmem>>, %arg10: memref<1x4x8xf32, #tpu.memory_space<vmem>>) attributes {dimension_semantics = [#tpu.dimension_semantics<parallel>, #tpu.dimension_semantics<parallel>], iteration_bounds = array<i64: 2, 1>, scalar_prefetch = 0 : i64, scratch_operands = 0 : i64, tpu.core_type = #tpu.core_type<tc>, window_params = [{transform_indices = @transform_0, window_bounds = array<i64: 1, 4, 8, 1>}, {transform_indices = @transform_1, window_bounds = array<i64: 1, 1, 8, 1>}, {transform_indices = @transform_2, window_bounds = array<i64: 1, 4, 8, 8>}, {transform_indices = @transform_3, window_bounds = array<i64: 1, 4, 8, 8>}, {transform_indices = @transform_4, window_bounds = array<i64: 1, 1, 8, 8>}, {transform_indices = @transform_5, window_bounds = array<i64: 1, 4, 8, 8>}, {transform_indices = @transform_6, window_bounds = array<i64: 1, 1, 8, 8>}, {transform_indices = @transform_7, window_bounds = array<i64: 1, 4, 8, 8>}, {transform_indices = @transform_8, window_bounds = array<i64: 1, 4, 8>}]} {
    %c0 = arith.constant 0 : index
    %c0_0 = arith.constant 0 : index
    %c0_1 = arith.constant 0 : index
    %c0_2 = arith.constant 0 : index
    %0 = vector.load %arg4[%c0, %c0_0, %c0_1, %c0_2] : memref<1x4x8x8xbf16, #tpu.memory_space<vmem>>, vector<1x4x8x8xbf16>
    %1 = vector.shape_cast %0 : vector<1x4x8x8xbf16> to vector<4x8x8xbf16>
    %c0_3 = arith.constant 0 : index
    %c0_4 = arith.constant 0 : index
    %c0_5 = arith.constant 0 : index
    %c0_6 = arith.constant 0 : index
    %2 = vector.load %arg5[%c0_3, %c0_4, %c0_5, %c0_6] : memref<1x4x8x8xbf16, #tpu.memory_space<vmem>>, vector<1x4x8x8xbf16>
    %3 = vector.shape_cast %2 : vector<1x4x8x8xbf16> to vector<4x8x8xbf16>
    %c0_7 = arith.constant 0 : index
    %c0_8 = arith.constant 0 : index
    %c0_9 = arith.constant 0 : index
    %c0_10 = arith.constant 0 : index
    %4 = vector.load %arg7[%c0_7, %c0_8, %c0_9, %c0_10] : memref<1x4x8x8xbf16, #tpu.memory_space<vmem>>, vector<1x4x8x8xbf16>
    %5 = vector.shape_cast %4 : vector<1x4x8x8xbf16> to vector<4x8x8xbf16>
    %c0_11 = arith.constant 0 : index
    %c0_12 = arith.constant 0 : index
    %c0_13 = arith.constant 0 : index
    %c0_14 = arith.constant 0 : index
    %6 = vector.load %arg2[%c0_11, %c0_12, %c0_13, %c0_14] : memref<1x4x8x1xi32, #tpu.memory_space<vmem>>, vector<1x4x8x1xi32>
    %7 = vector.shape_cast %6 : vector<1x4x8x1xi32> to vector<4x8xi32>
    %c0_15 = arith.constant 0 : index
    %c0_16 = arith.constant 0 : index
    %c0_17 = arith.constant 0 : index
    %c0_18 = arith.constant 0 : index
    %8 = vector.load %arg3[%c0_15, %c0_16, %c0_17, %c0_18] : memref<1x1x8x1xi32, #tpu.memory_space<vmem>>, vector<1x1x8x1xi32>
    %9 = vector.shape_cast %8 : vector<1x1x8x1xi32> to vector<1x8xi32>
    %c0_19 = arith.constant 0 : index
    %c0_20 = arith.constant 0 : index
    %c0_21 = arith.constant 0 : index
    %c0_22 = arith.constant 0 : index
    %10 = vector.load %arg6[%c0_19, %c0_20, %c0_21, %c0_22] : memref<1x1x8x8xbf16, #tpu.memory_space<vmem>>, vector<1x1x8x8xbf16>
    %11 = vector.shape_cast %10 : vector<1x1x8x8xbf16> to vector<1x8x8xbf16>
    %12 = vector.extract_strided_slice %3 {offsets = [0, 0, 0], sizes = [3, 8, 8], strides = [1, 1, 1]} : vector<4x8x8xbf16> to vector<3x8x8xbf16>
    %13 = tpu.concatenate %11, %12 in 0 : vector<1x8x8xbf16>, vector<3x8x8xbf16> -> vector<4x8x8xbf16>
    %c0_23 = arith.constant 0 : index
    %c0_24 = arith.constant 0 : index
    %c0_25 = arith.constant 0 : index
    %c0_26 = arith.constant 0 : index
    %14 = vector.load %arg8[%c0_23, %c0_24, %c0_25, %c0_26] : memref<1x1x8x8xbf16, #tpu.memory_space<vmem>>, vector<1x1x8x8xbf16>
    %15 = vector.shape_cast %14 : vector<1x1x8x8xbf16> to vector<1x8x8xbf16>
    %16 = vector.extract_strided_slice %5 {offsets = [0, 0, 0], sizes = [3, 8, 8], strides = [1, 1, 1]} : vector<4x8x8xbf16> to vector<3x8x8xbf16>
    %17 = tpu.concatenate %15, %16 in 0 : vector<1x8x8xbf16>, vector<3x8x8xbf16> -> vector<4x8x8xbf16>
    %18 = vector.extract_strided_slice %7 {offsets = [0, 0], sizes = [3, 8], strides = [1, 1]} : vector<4x8xi32> to vector<3x8xi32>
    %19 = tpu.concatenate %9, %18 in 0 : vector<1x8xi32>, vector<3x8xi32> -> vector<4x8xi32>
    %20 = tpu.concatenate %3, %13 in 1 : vector<4x8x8xbf16>, vector<4x8x8xbf16> -> vector<4x16x8xbf16>
    %21 = tpu.concatenate %5, %17 in 1 : vector<4x8x8xbf16>, vector<4x8x8xbf16> -> vector<4x16x8xbf16>
    %22 = tpu.concatenate %7, %19 in 1 : vector<4x8xi32>, vector<4x8xi32> -> vector<4x16xi32>
    "tpu.trace_start"() <{level = 10 : i32, message = "cqd,ckd->cqk"}> : () -> ()
    %cst = arith.constant dense<0.000000e+00> : vector<4x8x16xf32>
    %23 = tpu.matmul %1, %20, %cst {dimension_numbers = #tpu.dot_dimension_numbers<[2], [2], [1], [1], [0, 0, 0, 1, 1, 1], [0], [0]>} : vector<4x8x8xbf16>, vector<4x16x8xbf16>, vector<4x8x16xf32> -> vector<4x8x16xf32>
    "tpu.trace_stop"() : () -> ()
    %24 = vector.shape_cast %7 : vector<4x8xi32> to vector<4x8x1xi32>
    %25 = vector.shape_cast %22 : vector<4x16xi32> to vector<4x1x16xi32>
    %26 = vector.broadcast %24 : vector<4x8x1xi32> to vector<4x8x16xi32>
    %27 = vector.broadcast %25 : vector<4x1x16xi32> to vector<4x8x16xi32>
    %28 = arith.cmpi eq, %26, %27 : vector<4x8x16xi32>
    %cst_27 = arith.constant -5.000000e+04 : f32
    %29 = vector.broadcast %cst_27 : f32 to vector<4x8x16xf32>
    %30 = arith.select %28, %29, %23 : vector<4x8x16xi1>, vector<4x8x16xf32>
    %cst_28 = arith.constant dense<0xFF800000> : vector<4x8xf32>
    %31 = vector.multi_reduction <maximumf>, %30, %cst_28 [2] : vector<4x8x16xf32> to vector<4x8xf32>
    %32 = vector.shape_cast %31 : vector<4x8xf32> to vector<4x8x1xf32>
    %33 = vector.broadcast %32 : vector<4x8x1xf32> to vector<4x8x16xf32>
    %34 = arith.subf %30, %33 : vector<4x8x16xf32>
    %35 = math.exp %34 : vector<4x8x16xf32>
    %cst_29 = arith.constant dense<0.000000e+00> : vector<4x8xf32>
    %36 = vector.multi_reduction <add>, %35, %cst_29 [2] : vector<4x8x16xf32> to vector<4x8xf32>
    %37 = vector.shape_cast %36 : vector<4x8xf32> to vector<4x8x1xf32>
    %38 = tpu.reciprocal %37 {approx = true} : vector<4x8x1xf32> -> vector<4x8x1xf32>
    %39 = vector.broadcast %38 : vector<4x8x1xf32> to vector<4x8x16xf32>
    %40 = arith.mulf %35, %39 : vector<4x8x16xf32>
    %41 = math.log %37 : vector<4x8x1xf32>
    %42 = arith.addf %32, %41 : vector<4x8x1xf32>
    %43 = arith.truncf %40 : vector<4x8x16xf32> to vector<4x8x16xbf16>
    "tpu.trace_start"() <{level = 10 : i32, message = "cqk,ckd->cqd"}> : () -> ()
    %cst_30 = arith.constant dense<0.000000e+00> : vector<4x8x8xf32>
    %44 = tpu.matmul %43, %21, %cst_30 {dimension_numbers = #tpu.dot_dimension_numbers<[2], [1], [1], [2], [0, 0, 0, 1, 1, 2], [0], [0]>} : vector<4x8x16xbf16>, vector<4x16x8xbf16>, vector<4x8x8xf32> -> vector<4x8x8xf32>
    "tpu.trace_stop"() : () -> ()
    %c0_31 = arith.constant 0 : index
    %c0_32 = arith.constant 0 : index
    %c0_33 = arith.constant 0 : index
    %c0_34 = arith.constant 0 : index
    %45 = vector.load %arg9[%c0_31, %c0_32, %c0_33, %c0_34] : memref<1x4x8x8xf32, #tpu.memory_space<vmem>>, vector<1x4x8x8xf32>
    %46 = vector.shape_cast %45 : vector<1x4x8x8xf32> to vector<4x8x8xf32>
    %47 = vector.shape_cast %44 : vector<4x8x8xf32> to vector<1x4x8x8xf32>
    tpu.vector_store %arg9[%c0_31, %c0_32, %c0_33, %c0_34], %47 {strides = array<i32>} : memref<1x4x8x8xf32, #tpu.memory_space<vmem>>, vector<1x4x8x8xf32>,
    %48 = vector.shape_cast %42 : vector<4x8x1xf32> to vector<4x8xf32>
    %c0_35 = arith.constant 0 : index
    %c0_36 = arith.constant 0 : index
    %c0_37 = arith.constant 0 : index
    %49 = vector.load %arg10[%c0_35, %c0_36, %c0_37] : memref<1x4x8xf32, #tpu.memory_space<vmem>>, vector<1x4x8xf32>
    %50 = vector.shape_cast %49 : vector<1x4x8xf32> to vector<4x8xf32>
    %51 = vector.shape_cast %48 : vector<4x8xf32> to vector<1x4x8xf32>
    tpu.vector_store %arg10[%c0_35, %c0_36, %c0_37], %51 {strides = array<i32>} : memref<1x4x8xf32, #tpu.memory_space<vmem>>, vector<1x4x8xf32>,
    return
  }
  func.func @transform_0(%arg0: i32, %arg1: i32) -> (i32, i32, i32, i32) {
    %c0_i32 = arith.constant 0 : i32
    %c0_i32_0 = arith.constant 0 : i32
    %c0_i32_1 = arith.constant 0 : i32
    return %arg0, %arg1, %c0_i32, %c0_i32_0 : i32, i32, i32, i32
  }
  func.func @transform_1(%arg0: i32, %arg1: i32) -> (i32, i32, i32, i32) {
    %c4_i32 = arith.constant 4 : i32
    %0 = arith.muli %arg1, %c4_i32 : i32
    %c4_i32_0 = arith.constant 4 : i32
    %1 = arith.addi %0, %c4_i32_0 : i32
    %c1_i32 = arith.constant 1 : i32
    %2 = arith.subi %1, %c1_i32 : i32
    %c4_i32_1 = arith.constant 4 : i32
    %c0_i32 = arith.constant 0 : i32
    %3 = arith.cmpi eq, %c4_i32_1, %c0_i32 : i32
    %c1_i32_2 = arith.constant 1 : i32
    %4 = arith.select %3, %c1_i32_2, %c4_i32_1 : i32
    %5 = arith.remsi %2, %4 : i32
    %c0_i32_3 = arith.constant 0 : i32
    %6 = arith.cmpi ne, %5, %c0_i32_3 : i32
    %c0_i32_4 = arith.constant 0 : i32
    %7 = arith.cmpi slt, %5, %c0_i32_4 : i32
    %c0_i32_5 = arith.constant 0 : i32
    %8 = arith.cmpi slt, %4, %c0_i32_5 : i32
    %9 = arith.xori %7, %8 : i1
    %10 = arith.andi %9, %6 : i1
    %11 = arith.addi %5, %4 : i32
    %12 = arith.select %10, %11, %5 : i32
    %c0_i32_6 = arith.constant 0 : i32
    %c0_i32_7 = arith.constant 0 : i32
    %c0_i32_8 = arith.constant 0 : i32
    return %arg0, %12, %c0_i32_6, %c0_i32_7 : i32, i32, i32, i32
  }
  func.func @transform_2(%arg0: i32, %arg1: i32) -> (i32, i32, i32, i32) {
    %c0_i32 = arith.constant 0 : i32
    %c0_i32_0 = arith.constant 0 : i32
    %c0_i32_1 = arith.constant 0 : i32
    return %arg0, %arg1, %c0_i32, %c0_i32_0 : i32, i32, i32, i32
  }
  func.func @transform_3(%arg0: i32, %arg1: i32) -> (i32, i32, i32, i32) {
    %c0_i32 = arith.constant 0 : i32
    %c0_i32_0 = arith.constant 0 : i32
    %c0_i32_1 = arith.constant 0 : i32
    return %arg0, %arg1, %c0_i32, %c0_i32_0 : i32, i32, i32, i32
  }
  func.func @transform_4(%arg0: i32, %arg1: i32) -> (i32, i32, i32, i32) {
    %c4_i32 = arith.constant 4 : i32
    %0 = arith.muli %arg1, %c4_i32 : i32
    %c4_i32_0 = arith.constant 4 : i32
    %1 = arith.addi %0, %c4_i32_0 : i32
    %c1_i32 = arith.constant 1 : i32
    %2 = arith.subi %1, %c1_i32 : i32
    %c4_i32_1 = arith.constant 4 : i32
    %c0_i32 = arith.constant 0 : i32
    %3 = arith.cmpi eq, %c4_i32_1, %c0_i32 : i32
    %c1_i32_2 = arith.constant 1 : i32
    %4 = arith.select %3, %c1_i32_2, %c4_i32_1 : i32
    %5 = arith.remsi %2, %4 : i32
    %c0_i32_3 = arith.constant 0 : i32
    %6 = arith.cmpi ne, %5, %c0_i32_3 : i32
    %c0_i32_4 = arith.constant 0 : i32
    %7 = arith.cmpi slt, %5, %c0_i32_4 : i32
    %c0_i32_5 = arith.constant 0 : i32
    %8 = arith.cmpi slt, %4, %c0_i32_5 : i32
    %9 = arith.xori %7, %8 : i1
    %10 = arith.andi %9, %6 : i1
    %11 = arith.addi %5, %4 : i32
    %12 = arith.select %10, %11, %5 : i32
    %c0_i32_6 = arith.constant 0 : i32
    %c0_i32_7 = arith.constant 0 : i32
    %c0_i32_8 = arith.constant 0 : i32
    return %arg0, %12, %c0_i32_6, %c0_i32_7 : i32, i32, i32, i32
  }
  func.func @transform_5(%arg0: i32, %arg1: i32) -> (i32, i32, i32, i32) {
    %c0_i32 = arith.constant 0 : i32
    %c0_i32_0 = arith.constant 0 : i32
    %c0_i32_1 = arith.constant 0 : i32
    return %arg0, %arg1, %c0_i32, %c0_i32_0 : i32, i32, i32, i32
  }
  func.func @transform_6(%arg0: i32, %arg1: i32) -> (i32, i32, i32, i32) {
    %c4_i32 = arith.constant 4 : i32
    %0 = arith.muli %arg1, %c4_i32 : i32
    %c4_i32_0 = arith.constant 4 : i32
    %1 = arith.addi %0, %c4_i32_0 : i32
    %c1_i32 = arith.constant 1 : i32
    %2 = arith.subi %1, %c1_i32 : i32
    %c4_i32_1 = arith.constant 4 : i32
    %c0_i32 = arith.constant 0 : i32
    %3 = arith.cmpi eq, %c4_i32_1, %c0_i32 : i32
    %c1_i32_2 = arith.constant 1 : i32
    %4 = arith.select %3, %c1_i32_2, %c4_i32_1 : i32
    %5 = arith.remsi %2, %4 : i32
    %c0_i32_3 = arith.constant 0 : i32
    %6 = arith.cmpi ne, %5, %c0_i32_3 : i32
    %c0_i32_4 = arith.constant 0 : i32
    %7 = arith.cmpi slt, %5, %c0_i32_4 : i32
    %c0_i32_5 = arith.constant 0 : i32
    %8 = arith.cmpi slt, %4, %c0_i32_5 : i32
    %9 = arith.xori %7, %8 : i1
    %10 = arith.andi %9, %6 : i1
    %11 = arith.addi %5, %4 : i32
    %12 = arith.select %10, %11, %5 : i32
    %c0_i32_6 = arith.constant 0 : i32
    %c0_i32_7 = arith.constant 0 : i32
    %c0_i32_8 = arith.constant 0 : i32
    return %arg0, %12, %c0_i32_6, %c0_i32_7 : i32, i32, i32, i32
  }
  func.func @transform_7(%arg0: i32, %arg1: i32) -> (i32, i32, i32, i32) {
    %c0_i32 = arith.constant 0 : i32
    %c0_i32_0 = arith.constant 0 : i32
    %c0_i32_1 = arith.constant 0 : i32
    return %arg0, %arg1, %c0_i32, %c0_i32_0 : i32, i32, i32, i32
  }
  func.func @transform_8(%arg0: i32, %arg1: i32) -> (i32, i32, i32) {
    %c0_i32 = arith.constant 0 : i32
    %c0_i32_0 = arith.constant 0 : i32
    return %arg0, %arg1, %c0_i32 : i32, i32, i32
  }
}

</mosaic_0001>

<llo_original>
// kernel: tpu_custom_call.1
$region0: #{tpu_custom_call.1}
  #allocation0 [shape = 'u32[]', space=smem, size = 0x4, offset = 0x4, fixed_abs, tag = 'smem constant byte address 0x4 - core index']
  #allocation1 [shape = 'u32[72,128]{1,0:T(1,128)}', space=vmem, size = 0x9000, scoped, tag = 'internal scratch']
  %s0 = inlined_call_operand.vmem [shape: s32[2,4,8,1], index: 0, kind: input, shape index: {}]
  %s1 = inlined_call_operand.vmem [shape: s32[2,4,8,1], index: 1, kind: input, shape index: {}]
  %s2 = inlined_call_operand.vmem [shape: bf16[2,4,8,8], index: 2, kind: input, shape index: {}]
  %s3 = inlined_call_operand.vmem [shape: bf16[2,4,8,8], index: 3, kind: input, shape index: {}]
  %s4 = inlined_call_operand.vmem [shape: bf16[2,4,8,8], index: 4, kind: input, shape index: {}]
  %s5 = inlined_call_operand.vmem [shape: bf16[2,4,8,8], index: 5, kind: input, shape index: {}]
  %s6 = inlined_call_operand.hbm [shape: bf16[2,4,8,8], index: 6, kind: input, shape index: {}]
  %s7 = inlined_call_operand.hbm [shape: f32[2,4,8,8], index: 7, kind: output, shape index: {0}]
  %s8 = inlined_call_operand.hbm [shape: f32[2,4,8], index: 8, kind: output, shape index: {1}]
  %9 = xla_tuple %s7, %s8
  %s10 = sld [smem:[#allocation0]]
  $region73: #{tpu_custom_call.1} parent=0
    _
  %s12 = ssub.s32 1, %s10
  %s13 = scalar_select 0, %s12, %s10
  $region1: #{tpu_custom_call.1} parent=0
    #allocation2 [shape = 'u8[4096]{0}', space=vmem, size = 0x1000, scoped, tag = 'input window, operand 6']
    #allocation3 [shape = 's32[2]{0}', space=sflag, size = 0x8, scoped, tag = 'scoped memory for tpu_custom_call.1']
    #allocation4 [shape = 's32[2]{0}', space=sflag, size = 0x8, scoped, tag = 'scoped memory for tpu_custom_call.1']
    #allocation5 [shape = 'u8[32768]{0}', space=vmem, size = 0x8000, scoped, tag = 'output window, operand 0']
    #allocation6 [shape = 'u8[4096]{0}', space=vmem, size = 0x1000, scoped, tag = 'output window, operand 1']
    #allocation7 [shape = 's32[2]{0}', space=sflag, size = 0x8, scoped, tag = 'scoped memory for tpu_custom_call.1']
    %14 = vsyncpa [#allocation3], 0
    %s15 = scalar_lea.sflag [#allocation3], 1
    %16 = vsyncpa %s15, 0
    %17 = vsyncpa [#allocation4], 0
    %s18 = scalar_lea.sflag [#allocation4], 1
    %19 = vsyncpa %s18, 0
    %20 = vsyncpa [#allocation7], 0
    %s21 = scalar_lea.sflag [#allocation7], 1
    %22 = vsyncpa %s21, 0
    loop: start=0, step=1, limit=4
    $region2: #{tpu_custom_call.1} parent=1 // loop_pre_header
      _
    $region3: #{tpu_custom_call.1} parent=1 // loop_header
      %s24 = sphi 0, %s28
      %p25 = scmp.ge.s32.totalorder %s24, 4
      %s31 = sphi 0, %s43
      %s32 = sphi 0, %s39
      %s33 = sphi 0, %s31
      %s34 = sphi 0, %s32
      %s35 = sphi 0, %s33
      %s36 = sphi 0, %s34
      %s48 = sphi 0, %s50
      %s51 = sphi 0, %s48
      %s52 = sphi 0, %s51
      %s68 = sphi 0, %s52
      %s104 = sphi 0, %s106
      %s107 = sphi 0, %s104
      %s108 = sphi 0, %s107
      %s124 = sphi 0, %s108
      %s132 = sphi 0, %s134
      %s135 = sphi 0, %s132
      %s136 = sphi 0, %s135
      %s152 = sphi 0, %s136
      %s160 = sphi 0, %s162
      %s163 = sphi 0, %s160
      %s164 = sphi 0, %s163
      %s180 = sphi 0, %s164
      %s216 = sphi 0, %s218
      %s219 = sphi 0, %s216
      %s220 = sphi 0, %s219
      %s236 = sphi 0, %s220
      %s244 = sphi 0, %s246
      %s247 = sphi 0, %s244
      %s248 = sphi 0, %s247
      %s264 = sphi 0, %s248
      %s300 = sphi 0, %s302
      %s303 = sphi 0, %s300
      %s304 = sphi 0, %s303
      %s320 = sphi 0, %s304
      %s328 = sphi 0, %s330
      %s331 = sphi 0, %s328
      %s332 = sphi 0, %s331
      %s348 = sphi 0, %s332
      %s356 = sphi 0, %s358
      %s359 = sphi 0, %s356
      %s360 = sphi 0, %s359
      %s376 = sphi 0, %s360
    $region4: #{tpu_custom_call.1} parent=1 // loop_header_branch
      %27 = sbr.rel (%p25) target = $region8
    $region5: #{tpu_custom_call.1} parent=1 // loop_body
      %s29 = ssub.s32 %s24, 1
      %s30 = ssub.s32 %s24, 2
      %s37 = sadd.s32 1, %s32
      %p38 = scmp.ge.s32.totalorder %s37, 1
      %s39 = scalar_select %p38, 0, %s37
      %s40 = sadd.s32 1, %s31
      %s41 = scalar_select %p38, %s40, %s31
      %p42 = scmp.ge.s32.totalorder %s41, 2
      %s43 = scalar_select %p42, 0, %s41
      %s44 = ssub.s32 %s31, %s43
      %s45 = ssub.s32 %s32, %s39
      %s46 = sor.u32 %s44, %s45
      %p47 = scmp.eq.s32.totalorder %s46, 0
      %s49 = sadd.s32 %s48, 1
      %s50 = scalar_select %p47, %s48, %s49
      %p53 = pneg %p47
      %p54 = scmp.eq.s32.totalorder %s24, 1
      %p55 = por %p53, %p54
      %p56 = scmp.ne.s32.totalorder %s48, %s51
      %p57 = scmp.eq.s32.totalorder %s24, 0
      %p58 = por %p56, %p57
      %p59 = scmp.ne.s32.totalorder %s48, %s51
      %p60 = scmp.eq.s32.totalorder %s29, 1
      %p61 = por %p59, %p60
      %p62 = scmp.ne.s32.totalorder %s51, %s52
      %p63 = scmp.eq.s32.totalorder %s29, 0
      %p64 = por %p62, %p63
      %p65 = scmp.ne.s32.totalorder %s51, %s52
      %p66 = scmp.eq.s32.totalorder %s30, 1
      %p67 = por %p65, %p66
      %p69 = scmp.ne.s32.totalorder %s52, %s68
      %p70 = scmp.eq.s32.totalorder %s30, 0
      %p71 = por %p69, %p70
      %s72 = smul.u32 %s32, 4
      %s73 = sadd.s32 %s72, 3
      %p74 = scmp.lt.s32.totalorder %s73, 0
      %s75 = ssub.s32 0, %s73
      %s76 = scalar_select %p74, %s75, %s73
      %s77 = sand.u32 %s76, 3
      %s78 = ssub.s32 0, %s77
      %s79 = scalar_select %p74, %s78, %s77
      %p80 = scmp.ne.s32.totalorder %s79, 0
      %p81 = scmp.lt.s32.totalorder %s79, 0
      %p82 = pnand %p81, %p80
      %p83 = pneg %p82
      %s84 = sadd.s32 %s79, 4
      %s85 = scalar_select %p83, %s84, %s79
      %s86 = smul.u32 %s39, 4
      %s87 = sadd.s32 %s86, 3
      %p88 = scmp.lt.s32.totalorder %s87, 0
      %s89 = ssub.s32 0, %s87
      %s90 = scalar_select %p88, %s89, %s87
      %s91 = sand.u32 %s90, 3
      %s92 = ssub.s32 0, %s91
      %s93 = scalar_select %p88, %s92, %s91
      %p94 = scmp.ne.s32.totalorder %s93, 0
      %p95 = scmp.lt.s32.totalorder %s93, 0
      %p96 = pnand %p95, %p94
      %p97 = pneg %p96
      %s98 = sadd.s32 %s93, 4
      %s99 = scalar_select %p97, %s98, %s93
      %s100 = ssub.s32 %s31, %s43
      %s101 = ssub.s32 %s85, %s99
      %s102 = sor.u32 %s100, %s101
      %p103 = scmp.eq.s32.totalorder %s102, 0
      %s105 = sadd.s32 %s104, 1
      %s106 = scalar_select %p103, %s104, %s105
      %p109 = pneg %p103
      %p110 = scmp.eq.s32.totalorder %s24, 1
      %p111 = por %p109, %p110
      %p112 = scmp.ne.s32.totalorder %s104, %s107
      %p113 = scmp.eq.s32.totalorder %s24, 0
      %p114 = por %p112, %p113
      %p115 = scmp.ne.s32.totalorder %s104, %s107
      %p116 = scmp.eq.s32.totalorder %s29, 1
      %p117 = por %p115, %p116
      %p118 = scmp.ne.s32.totalorder %s107, %s108
      %p119 = scmp.eq.s32.totalorder %s29, 0
      %p120 = por %p118, %p119
      %p121 = scmp.ne.s32.totalorder %s107, %s108
      %p122 = scmp.eq.s32.totalorder %s30, 1
      %p123 = por %p121, %p122
      %p125 = scmp.ne.s32.totalorder %s108, %s124
      %p126 = scmp.eq.s32.totalorder %s30, 0
      %p127 = por %p125, %p126
      %s128 = ssub.s32 %s31, %s43
      %s129 = ssub.s32 %s32, %s39
      %s130 = sor.u32 %s128, %s129
      %p131 = scmp.eq.s32.totalorder %s130, 0
      %s133 = sadd.s32 %s132, 1
      %s134 = scalar_select %p131, %s132, %s133
      %p137 = pneg %p131
      %p138 = scmp.eq.s32.totalorder %s24, 1
      %p139 = por %p137, %p138
      %p140 = scmp.ne.s32.totalorder %s132, %s135
      %p141 = scmp.eq.s32.totalorder %s24, 0
      %p142 = por %p140, %p141
      %p143 = scmp.ne.s32.totalorder %s132, %s135
      %p144 = scmp.eq.s32.totalorder %s29, 1
      %p145 = por %p143, %p144
      %p146 = scmp.ne.s32.totalorder %s135, %s136
      %p147 = scmp.eq.s32.totalorder %s29, 0
      %p148 = por %p146, %p147
      %p149 = scmp.ne.s32.totalorder %s135, %s136
      %p150 = scmp.eq.s32.totalorder %s30, 1
      %p151 = por %p149, %p150
      %p153 = scmp.ne.s32.totalorder %s136, %s152
      %p154 = scmp.eq.s32.totalorder %s30, 0
      %p155 = por %p153, %p154
      %s156 = ssub.s32 %s31, %s43
      %s157 = ssub.s32 %s32, %s39
      %s158 = sor.u32 %s156, %s157
      %p159 = scmp.eq.s32.totalorder %s158, 0
      %s161 = sadd.s32 %s160, 1
      %s162 = scalar_select %p159, %s160, %s161
      %p165 = pneg %p159
      %p166 = scmp.eq.s32.totalorder %s24, 1
      %p167 = por %p165, %p166
      %p168 = scmp.ne.s32.totalorder %s160, %s163
      %p169 = scmp.eq.s32.totalorder %s24, 0
      %p170 = por %p168, %p169
      %p171 = scmp.ne.s32.totalorder %s160, %s163
      %p172 = scmp.eq.s32.totalorder %s29, 1
      %p173 = por %p171, %p172
      %p174 = scmp.ne.s32.totalorder %s163, %s164
      %p175 = scmp.eq.s32.totalorder %s29, 0
      %p176 = por %p174, %p175
      %p177 = scmp.ne.s32.totalorder %s163, %s164
      %p178 = scmp.eq.s32.totalorder %s30, 1
      %p179 = por %p177, %p178
      %p181 = scmp.ne.s32.totalorder %s164, %s180
      %p182 = scmp.eq.s32.totalorder %s30, 0
      %p183 = por %p181, %p182
      %s184 = smul.u32 %s32, 4
      %s185 = sadd.s32 %s184, 3
      %p186 = scmp.lt.s32.totalorder %s185, 0
      %s187 = ssub.s32 0, %s185
      %s188 = scalar_select %p186, %s187, %s185
      %s189 = sand.u32 %s188, 3
      %s190 = ssub.s32 0, %s189
      %s191 = scalar_select %p186, %s190, %s189
      %p192 = scmp.ne.s32.totalorder %s191, 0
      %p193 = scmp.lt.s32.totalorder %s191, 0
      %p194 = pnand %p193, %p192
      %p195 = pneg %p194
      %s196 = sadd.s32 %s191, 4
      %s197 = scalar_select %p195, %s196, %s191
      %s198 = smul.u32 %s39, 4
      %s199 = sadd.s32 %s198, 3
      %p200 = scmp.lt.s32.totalorder %s199, 0
      %s201 = ssub.s32 0, %s199
      %s202 = scalar_select %p200, %s201, %s199
      %s203 = sand.u32 %s202, 3
      %s204 = ssub.s32 0, %s203
      %s205 = scalar_select %p200, %s204, %s203
      %p206 = scmp.ne.s32.totalorder %s205, 0
      %p207 = scmp.lt.s32.totalorder %s205, 0
      %p208 = pnand %p207, %p206
      %p209 = pneg %p208
      %s210 = sadd.s32 %s205, 4
      %s211 = scalar_select %p209, %s210, %s205
      %s212 = ssub.s32 %s31, %s43
      %s213 = ssub.s32 %s197, %s211
      %s214 = sor.u32 %s212, %s213
      %p215 = scmp.eq.s32.totalorder %s214, 0
      %s217 = sadd.s32 %s216, 1
      %s218 = scalar_select %p215, %s216, %s217
      %p221 = pneg %p215
      %p222 = scmp.eq.s32.totalorder %s24, 1
      %p223 = por %p221, %p222
      %p224 = scmp.ne.s32.totalorder %s216, %s219
      %p225 = scmp.eq.s32.totalorder %s24, 0
      %p226 = por %p224, %p225
      %p227 = scmp.ne.s32.totalorder %s216, %s219
      %p228 = scmp.eq.s32.totalorder %s29, 1
      %p229 = por %p227, %p228
      %p230 = scmp.ne.s32.totalorder %s219, %s220
      %p231 = scmp.eq.s32.totalorder %s29, 0
      %p232 = por %p230, %p231
      %p233 = scmp.ne.s32.totalorder %s219, %s220
      %p234 = scmp.eq.s32.totalorder %s30, 1
      %p235 = por %p233, %p234
      %p237 = scmp.ne.s32.totalorder %s220, %s236
      %p238 = scmp.eq.s32.totalorder %s30, 0
      %p239 = por %p237, %p238
      %s240 = ssub.s32 %s31, %s43
      %s241 = ssub.s32 %s32, %s39
      %s242 = sor.u32 %s240, %s241
      %p243 = scmp.eq.s32.totalorder %s242, 0
      %s245 = sadd.s32 %s244, 1
      %s246 = scalar_select %p243, %s244, %s245
      %p249 = pneg %p243
      %p250 = scmp.eq.s32.totalorder %s24, 1
      %p251 = por %p249, %p250
      %p252 = scmp.ne.s32.totalorder %s244, %s247
      %p253 = scmp.eq.s32.totalorder %s24, 0
      %p254 = por %p252, %p253
      %p255 = scmp.ne.s32.totalorder %s244, %s247
      %p256 = scmp.eq.s32.totalorder %s29, 1
      %p257 = por %p255, %p256
      %p258 = scmp.ne.s32.totalorder %s247, %s248
      %p259 = scmp.eq.s32.totalorder %s29, 0
      %p260 = por %p258, %p259
      %p261 = scmp.ne.s32.totalorder %s247, %s248
      %p262 = scmp.eq.s32.totalorder %s30, 1
      %p263 = por %p261, %p262
      %p265 = scmp.ne.s32.totalorder %s248, %s264
      %p266 = scmp.eq.s32.totalorder %s30, 0
      %p267 = por %p265, %p266
      %s268 = smul.u32 %s32, 4
      %s269 = sadd.s32 %s268, 3
      %p270 = scmp.lt.s32.totalorder %s269, 0
      %s271 = ssub.s32 0, %s269
      %s272 = scalar_select %p270, %s271, %s269
      %s273 = sand.u32 %s272, 3
      %s274 = ssub.s32 0, %s273
      %s275 = scalar_select %p270, %s274, %s273
      %p276 = scmp.ne.s32.totalorder %s275, 0
      %p277 = scmp.lt.s32.totalorder %s275, 0
      %p278 = pnand %p277, %p276
      %p279 = pneg %p278
      %s280 = sadd.s32 %s275, 4
      %s281 = scalar_select %p279, %s280, %s275
      %s282 = smul.u32 %s39, 4
      %s283 = sadd.s32 %s282, 3
      %p284 = scmp.lt.s32.totalorder %s283, 0
      %s285 = ssub.s32 0, %s283
      %s286 = scalar_select %p284, %s285, %s283
      %s287 = sand.u32 %s286, 3
      %s288 = ssub.s32 0, %s287
      %s289 = scalar_select %p284, %s288, %s287
      %p290 = scmp.ne.s32.totalorder %s289, 0
      %p291 = scmp.lt.s32.totalorder %s289, 0
      %p292 = pnand %p291, %p290
      %p293 = pneg %p292
      %s294 = sadd.s32 %s289, 4
      %s295 = scalar_select %p293, %s294, %s289
      %s296 = ssub.s32 %s31, %s43
      %s297 = ssub.s32 %s281, %s295
      %s298 = sor.u32 %s296, %s297
      %p299 = scmp.eq.s32.totalorder %s298, 0
      %s301 = sadd.s32 %s300, 1
      %s302 = scalar_select %p299, %s300, %s301
      %p305 = pneg %p299
      %p306 = scmp.eq.s32.totalorder %s24, 1
      %p307 = por %p305, %p306
      %p308 = scmp.ne.s32.totalorder %s300, %s303
      %p309 = scmp.eq.s32.totalorder %s24, 0
      %p310 = por %p308, %p309
      %p311 = scmp.ne.s32.totalorder %s300, %s303
      %p312 = scmp.eq.s32.totalorder %s29, 1
      %p313 = por %p311, %p312
      %p314 = scmp.ne.s32.totalorder %s303, %s304
      %p315 = scmp.eq.s32.totalorder %s29, 0
      %p316 = por %p314, %p315
      %p317 = scmp.ne.s32.totalorder %s303, %s304
      %p318 = scmp.eq.s32.totalorder %s30, 1
      %p319 = por %p317, %p318
      %p321 = scmp.ne.s32.totalorder %s304, %s320
      %p322 = scmp.eq.s32.totalorder %s30, 0
      %p323 = por %p321, %p322
      %s324 = ssub.s32 %s31, %s43
      %s325 = ssub.s32 %s32, %s39
      %s326 = sor.u32 %s324, %s325
      %p327 = scmp.eq.s32.totalorder %s326, 0
      %s329 = sadd.s32 %s328, 1
      %s330 = scalar_select %p327, %s328, %s329
      %p333 = pneg %p327
      %p334 = scmp.eq.s32.totalorder %s24, 1
      %p335 = por %p333, %p334
      %p336 = scmp.ne.s32.totalorder %s328, %s331
      %p337 = scmp.eq.s32.totalorder %s24, 0
      %p338 = por %p336, %p337
      %p339 = scmp.ne.s32.totalorder %s328, %s331
      %p340 = scmp.eq.s32.totalorder %s29, 1
      %p341 = por %p339, %p340
      %p342 = scmp.ne.s32.totalorder %s331, %s332
      %p343 = scmp.eq.s32.totalorder %s29, 0
      %p344 = por %p342, %p343
      %p345 = scmp.ne.s32.totalorder %s331, %s332
      %p346 = scmp.eq.s32.totalorder %s30, 1
      %p347 = por %p345, %p346
      %p349 = scmp.ne.s32.totalorder %s332, %s348
      %p350 = scmp.eq.s32.totalorder %s30, 0
      %p351 = por %p349, %p350
      %s352 = ssub.s32 %s31, %s43
      %s353 = ssub.s32 %s32, %s39
      %s354 = sor.u32 %s352, %s353
      %p355 = scmp.eq.s32.totalorder %s354, 0
      %s357 = sadd.s32 %s356, 1
      %s358 = scalar_select %p355, %s356, %s357
      %p361 = pneg %p355
      %p362 = scmp.eq.s32.totalorder %s24, 1
      %p363 = por %p361, %p362
      %p364 = scmp.ne.s32.totalorder %s356, %s359
      %p365 = scmp.eq.s32.totalorder %s24, 0
      %p366 = por %p364, %p365
      %p367 = scmp.ne.s32.totalorder %s356, %s359
      %p368 = scmp.eq.s32.totalorder %s29, 1
      %p369 = por %p367, %p368
      %p370 = scmp.ne.s32.totalorder %s359, %s360
      %p371 = scmp.eq.s32.totalorder %s29, 0
      %p372 = por %p370, %p371
      %p373 = scmp.ne.s32.totalorder %s359, %s360
      %p374 = scmp.eq.s32.totalorder %s30, 1
      %p375 = por %p373, %p374
      %p377 = scmp.ne.s32.totalorder %s360, %s376
      %p378 = scmp.eq.s32.totalorder %s30, 0
      %p379 = por %p377, %p378
      %p380 = scmp.le.s32.totalorder 1, %s24
      %p381 = scmp.lt.s32.totalorder %s24, 3
      %p382 = pnand %p380, %p381
      %p383 = pneg %p382
      // Predicated region
      $region9: #{tpu_custom_call.1} parent=5 // pred_check
        _
      $region10: #{tpu_custom_call.1} parent=5 // pred_check_branch
        %385 = sbr.rel (%p382) target = $region12
      $region11: #{tpu_custom_call.1} parent=5 // pred_region
        %s386 = ssub.s32 %s24, 1
      $region12: #{tpu_custom_call.1} parent=5 // pred_fallthru
        _
      %p387 = scmp.lt.s32.totalorder %s24, 2
      // Predicated region
      $region13: #{tpu_custom_call.1} parent=5 // pred_check
        %p388 = pneg %p387
      $region14: #{tpu_custom_call.1} parent=5 // pred_check_branch
        %390 = sbr.rel (%p388) target = $region16
      $region15: #{tpu_custom_call.1} parent=5 // pred_region
        // Predicated region
        $region17: #{tpu_custom_call.1} parent=15 // pred_check
          %p391 = pneg %p58
        $region18: #{tpu_custom_call.1} parent=15 // pred_check_branch
          %393 = sbr.rel (%p391) target = $region20
        $region19: #{tpu_custom_call.1} parent=15 // pred_region
          %s394 = smul.u32 4, %s32
          %p395 = scmp.lt.s32.totalorder %s31, 1
          %s396 = scalar_select %p395, %s31, 1
          %p397 = scmp.lt.s32.totalorder %s394, 3
          %s398 = scalar_select %p397, %s394, 3
          %s399 = smul.addr %s396, 4
          %s400 = sadd.s32 %s398, %s399
          %s401 = smul.addr %s400, 8
          %s402 = scalar_lea.vmem %s0, %s401
          %s403 = smul.u32 4, %s32
        $region20: #{tpu_custom_call.1} parent=15 // pred_fallthru
          _
        // Predicated region
        $region21: #{tpu_custom_call.1} parent=15 // pred_check
          %p404 = pneg %p114
        $region22: #{tpu_custom_call.1} parent=15 // pred_check_branch
          %406 = sbr.rel (%p404) target = $region24
        $region23: #{tpu_custom_call.1} parent=15 // pred_region
          %s407 = smul.u32 %s32, 4
          %s408 = sadd.s32 %s407, 3
          %p409 = scmp.lt.s32.totalorder %s408, 0
          %s410 = ssub.s32 0, %s408
          %s411 = scalar_select %p409, %s410, %s408
          %s412 = sand.u32 %s411, 3
          %s413 = ssub.s32 0, %s412
          %s414 = scalar_select %p409, %s413, %s412
          %p415 = scmp.ne.s32.totalorder %s414, 0
          %p416 = scmp.lt.s32.totalorder %s414, 0
          %p417 = pnand %p416, %p415
          %p418 = pneg %p417
          %s419 = sadd.s32 %s414, 4
          %s420 = scalar_select %p418, %s419, %s414
          %p421 = scmp.lt.s32.totalorder %s31, 1
          %s422 = scalar_select %p421, %s31, 1
          %p423 = scmp.lt.s32.totalorder %s420, 3
          %s424 = scalar_select %p423, %s420, 3
          %s425 = smul.addr %s422, 4
          %s426 = sadd.s32 %s424, %s425
          %s427 = smul.addr %s426, 8
          %s428 = scalar_lea.vmem %s1, %s427
          %s429 = smul.u32 %s32, 4
          %s430 = sadd.s32 %s429, 3
          %p431 = scmp.lt.s32.totalorder %s430, 0
          %s432 = ssub.s32 0, %s430
          %s433 = scalar_select %p431, %s432, %s430
          %s434 = sand.u32 %s433, 3
          %s435 = ssub.s32 0, %s434
          %s436 = scalar_select %p431, %s435, %s434
          %p437 = scmp.ne.s32.totalorder %s436, 0
          %p438 = scmp.lt.s32.totalorder %s436, 0
          %p439 = pnand %p438, %p437
          %p440 = pneg %p439
          %s441 = sadd.s32 %s436, 4
          %s442 = scalar_select %p440, %s441, %s436
        $region24: #{tpu_custom_call.1} parent=15 // pred_fallthru
          _
        // Predicated region
        $region25: #{tpu_custom_call.1} parent=15 // pred_check
          %p443 = pneg %p142
        $region26: #{tpu_custom_call.1} parent=15 // pred_check_branch
          %445 = sbr.rel (%p443) target = $region28
        $region27: #{tpu_custom_call.1} parent=15 // pred_region
          %s446 = smul.u32 4, %s32
          %p447 = scmp.lt.s32.totalorder %s31, 1
          %s448 = scalar_select %p447, %s31, 1
          %p449 = scmp.lt.s32.totalorder %s446, 3
          %s450 = scalar_select %p449, %s446, 3
          %s451 = smul.addr %s448, 4
          %s452 = sadd.s32 %s450, %s451
          %s453 = smul.addr %s452, 4
          %s454 = scalar_lea.vmem %s2, %s453
          %s455 = smul.u32 4, %s32
        $region28: #{tpu_custom_call.1} parent=15 // pred_fallthru
          _
        // Predicated region
        $region29: #{tpu_custom_call.1} parent=15 // pred_check
          %p456 = pneg %p170
        $region30: #{tpu_custom_call.1} parent=15 // pred_check_branch
          %458 = sbr.rel (%p456) target = $region32
        $region31: #{tpu_custom_call.1} parent=15 // pred_region
          %s459 = smul.u32 4, %s32
          %p460 = scmp.lt.s32.totalorder %s31, 1
          %s461 = scalar_select %p460, %s31, 1
          %p462 = scmp.lt.s32.totalorder %s459, 3
          %s463 = scalar_select %p462, %s459, 3
          %s464 = smul.addr %s461, 4
          %s465 = sadd.s32 %s463, %s464
          %s466 = smul.addr %s465, 4
          %s467 = scalar_lea.vmem %s3, %s466
          %s468 = smul.u32 4, %s32
        $region32: #{tpu_custom_call.1} parent=15 // pred_fallthru
          _
        // Predicated region
        $region33: #{tpu_custom_call.1} parent=15 // pred_check
          %p469 = pneg %p226
        $region34: #{tpu_custom_call.1} parent=15 // pred_check_branch
          %471 = sbr.rel (%p469) target = $region36
        $region35: #{tpu_custom_call.1} parent=15 // pred_region
          %s472 = smul.u32 %s32, 4
          %s473 = sadd.s32 %s472, 3
          %p474 = scmp.lt.s32.totalorder %s473, 0
          %s475 = ssub.s32 0, %s473
          %s476 = scalar_select %p474, %s475, %s473
          %s477 = sand.u32 %s476, 3
          %s478 = ssub.s32 0, %s477
          %s479 = scalar_select %p474, %s478, %s477
          %p480 = scmp.ne.s32.totalorder %s479, 0
          %p481 = scmp.lt.s32.totalorder %s479, 0
          %p482 = pnand %p481, %p480
          %p483 = pneg %p482
          %s484 = sadd.s32 %s479, 4
          %s485 = scalar_select %p483, %s484, %s479
          %p486 = scmp.lt.s32.totalorder %s31, 1
          %s487 = scalar_select %p486, %s31, 1
          %p488 = scmp.lt.s32.totalorder %s485, 3
          %s489 = scalar_select %p488, %s485, 3
          %s490 = smul.addr %s487, 4
          %s491 = sadd.s32 %s489, %s490
          %s492 = smul.addr %s491, 4
          %s493 = scalar_lea.vmem %s4, %s492
          %s494 = smul.u32 %s32, 4
          %s495 = sadd.s32 %s494, 3
          %p496 = scmp.lt.s32.totalorder %s495, 0
          %s497 = ssub.s32 0, %s495
          %s498 = scalar_select %p496, %s497, %s495
          %s499 = sand.u32 %s498, 3
          %s500 = ssub.s32 0, %s499
          %s501 = scalar_select %p496, %s500, %s499
          %p502 = scmp.ne.s32.totalorder %s501, 0
          %p503 = scmp.lt.s32.totalorder %s501, 0
          %p504 = pnand %p503, %p502
          %p505 = pneg %p504
          %s506 = sadd.s32 %s501, 4
          %s507 = scalar_select %p505, %s506, %s501
        $region36: #{tpu_custom_call.1} parent=15 // pred_fallthru
          _
        // Predicated region
        $region37: #{tpu_custom_call.1} parent=15 // pred_check
          %p508 = pneg %p254
        $region38: #{tpu_custom_call.1} parent=15 // pred_check_branch
          %510 = sbr.rel (%p508) target = $region40
        $region39: #{tpu_custom_call.1} parent=15 // pred_region
          %s511 = smul.u32 4, %s32
          %p512 = scmp.lt.s32.totalorder %s31, 1
          %s513 = scalar_select %p512, %s31, 1
          %p514 = scmp.lt.s32.totalorder %s511, 3
          %s515 = scalar_select %p514, %s511, 3
          %s516 = smul.addr %s513, 4
          %s517 = sadd.s32 %s515, %s516
          %s518 = smul.addr %s517, 4
          %s519 = scalar_lea.vmem %s5, %s518
          %s520 = smul.u32 4, %s32
        $region40: #{tpu_custom_call.1} parent=15 // pred_fallthru
          _
        // Predicated region
        $region41: #{tpu_custom_call.1} parent=15 // pred_check
          %p521 = pneg %p310
        $region42: #{tpu_custom_call.1} parent=15 // pred_check_branch
          %523 = sbr.rel (%p521) target = $region44
        $region43: #{tpu_custom_call.1} parent=15 // pred_region
          %s524 = sand.u32 %s300, 1
          %s525 = scalar_lea.sflag [#allocation3], %s524
          %s526 = sand.u32 %s300, 1
          %s527 = smul.addr %s526, 4
          %s528 = scalar_lea.vmem [#allocation2], %s527
          %s529 = smul.u32 %s32, 4
          %s530 = sadd.s32 %s529, 3
          %p531 = scmp.lt.s32.totalorder %s530, 0
          %s532 = ssub.s32 0, %s530
          %s533 = scalar_select %p531, %s532, %s530
          %s534 = sand.u32 %s533, 3
          %s535 = ssub.s32 0, %s534
          %s536 = scalar_select %p531, %s535, %s534
          %p537 = scmp.ne.s32.totalorder %s536, 0
          %p538 = scmp.lt.s32.totalorder %s536, 0
          %p539 = pnand %p538, %p537
          %p540 = pneg %p539
          %s541 = sadd.s32 %s536, 4
          %s542 = scalar_select %p540, %s541, %s536
          %544 = vsyncadd %s525, 0
          %s545 = smul.addr %s31, 4
          %s546 = sadd.s32 %s542, %s545
          %s547 = smul.addr %s546, 4
          %s548 = scalar_lea.hbm %s6, %s547
          %s550 = sshll.u32 %s548, 4
          %s551 = int_to_ptr.hbm [resolvable:$true] %s550
          %s552 = sshll.u32 %s528, 4
          %s553 = int_to_ptr.vmem [resolvable:$true] %s552
          %555 = dma.hbm_to_vmem [thread:$0]  %s551, 64, %s553, %s525
        $region44: #{tpu_custom_call.1} parent=15 // pred_fallthru
          _
      $region16: #{tpu_custom_call.1} parent=5 // pred_fallthru
        _
      %p556 = scmp.le.s32.totalorder 1, %s24
      %p557 = scmp.lt.s32.totalorder %s24, 3
      %p558 = pnand %p556, %p557
      %p559 = pneg %p558
      // Predicated region
      $region45: #{tpu_custom_call.1} parent=5 // pred_check
        _
      $region46: #{tpu_custom_call.1} parent=5 // pred_check_branch
        %561 = sbr.rel (%p558) target = $region48
      $region47: #{tpu_custom_call.1} parent=5 // pred_region
        %s562 = ssub.s32 %s24, 1
        %s563 = sand.u32 %s303, 1
        %s564 = scalar_lea.sflag [#allocation3], %s563
        %s565 = sand.u32 %s303, 1
        %s566 = smul.addr %s565, 4
        %s567 = scalar_lea.vmem [#allocation2], %s566
        // Predicated region
        $region49: #{tpu_custom_call.1} parent=47 // pred_check
          %p568 = pneg %p316
        $region50: #{tpu_custom_call.1} parent=47 // pred_check_branch
          %570 = sbr.rel (%p568) target = $region52
        $region51: #{tpu_custom_call.1} parent=47 // pred_region
          %572 = dma.done %s564, 64
        $region52: #{tpu_custom_call.1} parent=47 // pred_fallthru
          _
        %s573 = smul.u32 4, %s34
        %p574 = scmp.lt.s32.totalorder %s33, 1
        %s575 = scalar_select %p574, %s33, 1
        %p576 = scmp.lt.s32.totalorder %s573, 3
        %s577 = scalar_select %p576, %s573, 3
        %s578 = smul.addr %s575, 4
        %s579 = sadd.s32 %s577, %s578
        %s580 = smul.addr %s579, 8
        %s581 = scalar_lea.vmem %s0, %s580
        %p582 = pneg %p64
        %p583 = pneg %p61
        %s584 = smul.u32 %s34, 4
        %s585 = sadd.s32 %s584, 3
        %p586 = scmp.lt.s32.totalorder %s585, 0
        %s587 = ssub.s32 0, %s585
        %s588 = scalar_select %p586, %s587, %s585
        %s589 = sand.u32 %s588, 3
        %s590 = ssub.s32 0, %s589
        %s591 = scalar_select %p586, %s590, %s589
        %p592 = scmp.ne.s32.totalorder %s591, 0
        %p593 = scmp.lt.s32.totalorder %s591, 0
        %p594 = pnand %p593, %p592
        %p595 = pneg %p594
        %s596 = sadd.s32 %s591, 4
        %s597 = scalar_select %p595, %s596, %s591
        %p598 = scmp.lt.s32.totalorder %s33, 1
        %s599 = scalar_select %p598, %s33, 1
        %p600 = scmp.lt.s32.totalorder %s597, 3
        %s601 = scalar_select %p600, %s597, 3
        %s602 = smul.addr %s599, 4
        %s603 = sadd.s32 %s601, %s602
        %s604 = smul.addr %s603, 8
        %s605 = scalar_lea.vmem %s1, %s604
        %p606 = pneg %p120
        %p607 = pneg %p117
        %s608 = smul.u32 4, %s34
        %p609 = scmp.lt.s32.totalorder %s33, 1
        %s610 = scalar_select %p609, %s33, 1
        %p611 = scmp.lt.s32.totalorder %s608, 3
        %s612 = scalar_select %p611, %s608, 3
        %s613 = smul.addr %s610, 4
        %s614 = sadd.s32 %s612, %s613
        %s615 = smul.addr %s614, 4
        %s616 = scalar_lea.vmem %s2, %s615
        %p617 = pneg %p148
        %p618 = pneg %p145
        %s619 = smul.u32 4, %s34
        %p620 = scmp.lt.s32.totalorder %s33, 1
        %s621 = scalar_select %p620, %s33, 1
        %p622 = scmp.lt.s32.totalorder %s619, 3
        %s623 = scalar_select %p622, %s619, 3
        %s624 = smul.addr %s621, 4
        %s625 = sadd.s32 %s623, %s624
        %s626 = smul.addr %s625, 4
        %s627 = scalar_lea.vmem %s3, %s626
        %p628 = pneg %p176
        %p629 = pneg %p173
        %s630 = smul.u32 %s34, 4
        %s631 = sadd.s32 %s630, 3
        %p632 = scmp.lt.s32.totalorder %s631, 0
        %s633 = ssub.s32 0, %s631
        %s634 = scalar_select %p632, %s633, %s631
        %s635 = sand.u32 %s634, 3
        %s636 = ssub.s32 0, %s635
        %s637 = scalar_select %p632, %s636, %s635
        %p638 = scmp.ne.s32.totalorder %s637, 0
        %p639 = scmp.lt.s32.totalorder %s637, 0
        %p640 = pnand %p639, %p638
        %p641 = pneg %p640
        %s642 = sadd.s32 %s637, 4
        %s643 = scalar_select %p641, %s642, %s637
        %p644 = scmp.lt.s32.totalorder %s33, 1
        %s645 = scalar_select %p644, %s33, 1
        %p646 = scmp.lt.s32.totalorder %s643, 3
        %s647 = scalar_select %p646, %s643, 3
        %s648 = smul.addr %s645, 4
        %s649 = sadd.s32 %s647, %s648
        %s650 = smul.addr %s649, 4
        %s651 = scalar_lea.vmem %s4, %s650
        %p652 = pneg %p232
        %p653 = pneg %p229
        %s654 = smul.u32 4, %s34
        %p655 = scmp.lt.s32.totalorder %s33, 1
        %s656 = scalar_select %p655, %s33, 1
        %p657 = scmp.lt.s32.totalorder %s654, 3
        %s658 = scalar_select %p657, %s654, 3
        %s659 = smul.addr %s656, 4
        %s660 = sadd.s32 %s658, %s659
        %s661 = smul.addr %s660, 4
        %s662 = scalar_lea.vmem %s5, %s661
        %p663 = pneg %p260
        %p664 = pneg %p257
        %s665 = sand.u32 %s303, 1
        %s666 = scalar_lea.sflag [#allocation3], %s665
        %s667 = sand.u32 %s303, 1
        %s668 = smul.addr %s667, 4
        %s669 = scalar_lea.vmem [#allocation2], %s668
        %p670 = pneg %p316
        %p671 = pneg %p313
        %p672 = pneg %p344
        %p673 = pneg %p341
        %s674 = sand.u32 %s331, 1
        %s675 = scalar_lea.sflag [#allocation4], %s674
        %s676 = sand.u32 %s331, 1
        %s677 = smul.addr %s676, 32
        %s678 = scalar_lea.vmem [#allocation5], %s677
        %p679 = pneg %p372
        %p680 = pneg %p369
        %s681 = sand.u32 %s359, 1
        %s682 = scalar_lea.sflag [#allocation7], %s681
        %s683 = sand.u32 %s359, 1
        %s684 = smul.addr %s683, 4
        %s685 = scalar_lea.vmem [#allocation6], %s684
        %s686 = smul.u32 4, %s34
        %p687 = scmp.lt.s32.totalorder %s33, 1
        %s688 = scalar_select %p687, %s33, 1
        %p689 = scmp.lt.s32.totalorder %s686, 3
        %s690 = scalar_select %p689, %s686, 3
        %s691 = smul.addr %s688, 4
        %s692 = sadd.s32 %s690, %s691
        %s693 = smul.addr %s692, 8
        %s694 = scalar_lea.vmem %s0, %s693
        %s695 = smul.u32 4, %s34
        %s696 = smul.u32 %s34, 4
        %s697 = sadd.s32 %s696, 3
        %p698 = scmp.lt.s32.totalorder %s697, 0
        %s699 = ssub.s32 0, %s697
        %s700 = scalar_select %p698, %s699, %s697
        %s701 = sand.u32 %s700, 3
        %s702 = ssub.s32 0, %s701
        %s703 = scalar_select %p698, %s702, %s701
        %p704 = scmp.ne.s32.totalorder %s703, 0
        %p705 = scmp.lt.s32.totalorder %s703, 0
        %p706 = pnand %p705, %p704
        %p707 = pneg %p706
        %s708 = sadd.s32 %s703, 4
        %s709 = scalar_select %p707, %s708, %s703
        %p710 = scmp.lt.s32.totalorder %s33, 1
        %s711 = scalar_select %p710, %s33, 1
        %p712 = scmp.lt.s32.totalorder %s709, 3
        %s713 = scalar_select %p712, %s709, 3
        %s714 = smul.addr %s711, 4
        %s715 = sadd.s32 %s713, %s714
        %s716 = smul.addr %s715, 8
        %s717 = scalar_lea.vmem %s1, %s716
        %s718 = smul.u32 %s34, 4
        %s719 = sadd.s32 %s718, 3
        %p720 = scmp.lt.s32.totalorder %s719, 0
        %s721 = ssub.s32 0, %s719
        %s722 = scalar_select %p720, %s721, %s719
        %s723 = sand.u32 %s722, 3
        %s724 = ssub.s32 0, %s723
        %s725 = scalar_select %p720, %s724, %s723
        %p726 = scmp.ne.s32.totalorder %s725, 0
        %p727 = scmp.lt.s32.totalorder %s725, 0
        %p728 = pnand %p727, %p726
        %p729 = pneg %p728
        %s730 = sadd.s32 %s725, 4
        %s731 = scalar_select %p729, %s730, %s725
        %s732 = smul.u32 4, %s34
        %p733 = scmp.lt.s32.totalorder %s33, 1
        %s734 = scalar_select %p733, %s33, 1
        %p735 = scmp.lt.s32.totalorder %s732, 3
        %s736 = scalar_select %p735, %s732, 3
        %s737 = smul.addr %s734, 4
        %s738 = sadd.s32 %s736, %s737
        %s739 = smul.addr %s738, 4
        %s740 = scalar_lea.vmem %s2, %s739
        %s741 = smul.u32 4, %s34
        %s742 = smul.u32 4, %s34
        %p743 = scmp.lt.s32.totalorder %s33, 1
        %s744 = scalar_select %p743, %s33, 1
        %p745 = scmp.lt.s32.totalorder %s742, 3
        %s746 = scalar_select %p745, %s742, 3
        %s747 = smul.addr %s744, 4
        %s748 = sadd.s32 %s746, %s747
        %s749 = smul.addr %s748, 4
        %s750 = scalar_lea.vmem %s3, %s749
        %s751 = smul.u32 4, %s34
        %s752 = smul.u32 %s34, 4
        %s753 = sadd.s32 %s752, 3
        %p754 = scmp.lt.s32.totalorder %s753, 0
        %s755 = ssub.s32 0, %s753
        %s756 = scalar_select %p754, %s755, %s753
        %s757 = sand.u32 %s756, 3
        %s758 = ssub.s32 0, %s757
        %s759 = scalar_select %p754, %s758, %s757
        %p760 = scmp.ne.s32.totalorder %s759, 0
        %p761 = scmp.lt.s32.totalorder %s759, 0
        %p762 = pnand %p761, %p760
        %p763 = pneg %p762
        %s764 = sadd.s32 %s759, 4
        %s765 = scalar_select %p763, %s764, %s759
        %p766 = scmp.lt.s32.totalorder %s33, 1
        %s767 = scalar_select %p766, %s33, 1
        %p768 = scmp.lt.s32.totalorder %s765, 3
        %s769 = scalar_select %p768, %s765, 3
        %s770 = smul.addr %s767, 4
        %s771 = sadd.s32 %s769, %s770
        %s772 = smul.addr %s771, 4
        %s773 = scalar_lea.vmem %s4, %s772
        %s774 = smul.u32 %s34, 4
        %s775 = sadd.s32 %s774, 3
        %p776 = scmp.lt.s32.totalorder %s775, 0
        %s777 = ssub.s32 0, %s775
        %s778 = scalar_select %p776, %s777, %s775
        %s779 = sand.u32 %s778, 3
        %s780 = ssub.s32 0, %s779
        %s781 = scalar_select %p776, %s780, %s779
        %p782 = scmp.ne.s32.totalorder %s781, 0
        %p783 = scmp.lt.s32.totalorder %s781, 0
        %p784 = pnand %p783, %p782
        %p785 = pneg %p784
        %s786 = sadd.s32 %s781, 4
        %s787 = scalar_select %p785, %s786, %s781
        %s788 = smul.u32 4, %s34
        %p789 = scmp.lt.s32.totalorder %s33, 1
        %s790 = scalar_select %p789, %s33, 1
        %p791 = scmp.lt.s32.totalorder %s788, 3
        %s792 = scalar_select %p791, %s788, 3
        %s793 = smul.addr %s790, 4
        %s794 = sadd.s32 %s792, %s793
        %s795 = smul.addr %s794, 4
        %s796 = scalar_lea.vmem %s5, %s795
        %s797 = smul.u32 4, %s34
        %s798 = smul.u32 %s34, 4
        %s799 = sadd.s32 %s798, 3
        %p800 = scmp.lt.s32.totalorder %s799, 0
        %s801 = ssub.s32 0, %s799
        %s802 = scalar_select %p800, %s801, %s799
        %s803 = sand.u32 %s802, 3
        %s804 = ssub.s32 0, %s803
        %s805 = scalar_select %p800, %s804, %s803
        %p806 = scmp.ne.s32.totalorder %s805, 0
        %p807 = scmp.lt.s32.totalorder %s805, 0
        %p808 = pnand %p807, %p806
        %p809 = pneg %p808
        %s810 = sadd.s32 %s805, 4
        %s811 = scalar_select %p809, %s810, %s805
        %s812 = smul.u32 4, %s34
        %v814 = vld [vmem:[%s740] sm:$0xf]
        %v815 = vld [vmem:[%s740 + $0x4] sm:$0xf]
        %v816 = vld [vmem:[%s740 + $0x8] sm:$0xf]
        %v817 = vld [vmem:[%s740 + $0xc] sm:$0xf]
        %v818 = vld [vmem:[%s750] sm:$0xf]
        %v819 = vld [vmem:[%s750 + $0x4] sm:$0xf]
        %v820 = vld [vmem:[%s750 + $0x8] sm:$0xf]
        %v821 = vld [vmem:[%s750 + $0xc] sm:$0xf]
        %v822 = vld [vmem:[%s796] sm:$0xf]
        %v823 = vld [vmem:[%s796 + $0x4] sm:$0xf]
        %v824 = vld [vmem:[%s796 + $0x8] sm:$0xf]
        %v825 = vld [vmem:[%s796 + $0xc] sm:$0xf]
        %v826 = vld [vmem:[%s694] sm:$0xff]
        %v827 = vld [vmem:[%s694 + $0x8] sm:$0xff]
        %v828 = vld [vmem:[%s694 + $0x10] sm:$0xff]
        %v829 = vld [vmem:[%s694 + $0x18] sm:$0xff]
        %v830 = vld [vmem:[%s717] sm:$0xff]
        %v831 = vld [vmem:[%s773] sm:$0xf]
        %v832 = vld [vmem:[%s567] sm:$0xf]
        %833 = vset.pattern.permute.xlu0 0
        %834 = vperm.xlu0 %833, %v830
        %v835 = vpop.permute.xlu0 %834
        %v836 = vlaneseq
        %v837 = vand.u32 %v836, 127
        %v838 = vperm.slane %v835, %v837
        %839 = vset.pattern.permute.xlu0 0
        %840 = vperm.xlu0 %839, %v826
        %v841 = vpop.permute.xlu0 %840
        %842 = vset.pattern.permute.xlu0 0
        %843 = vperm.xlu0 %842, %v827
        %v844 = vpop.permute.xlu0 %843
        %845 = vset.pattern.permute.xlu0 0
        %846 = vperm.xlu0 %845, %v828
        %v847 = vpop.permute.xlu0 %846
        %v848 = vperm.slane %v841, %v837
        %v849 = vperm.slane %v844, %v837
        %v850 = vperm.slane %v847, %v837
        %vm851 = vcmask 1042434
        %v852 = vsel %vm851, %v849, %v848
        %vm853 = vcmask 1043459
        %v854 = vsel %vm853, %v850, %v852
        %vm855 = vcmask 1040384
        %v856 = vsel %vm855, %v838, %v854
        %v861 = vunpack.c.l.b16 %v831
        %v862 = vunpack.c.l.b16 %v818
        %v863 = vunpack.c.l.b16 %v819
        %v864 = vunpack.c.l.b16 %v820
        %v865 = vpack.c.b16 %v861, %v861
        %v866 = vpack.c.b16 %v862, %v862
        %v867 = vpack.c.b16 %v863, %v863
        %v868 = vpack.c.b16 %v864, %v864
        %vm869 = vcmask 1043456
        %v872 = vsel %vm869, %v818, %v865
        %v875 = vsel %vm869, %v819, %v866
        %v878 = vsel %vm869, %v820, %v867
        %v881 = vsel %vm869, %v821, %v868
        %v886 = vunpack.c.l.b16 %v832
        %v887 = vunpack.c.l.b16 %v822
        %v888 = vunpack.c.l.b16 %v823
        %v889 = vunpack.c.l.b16 %v824
        %v890 = vpack.c.b16 %v886, %v886
        %v891 = vpack.c.b16 %v887, %v887
        %v892 = vpack.c.b16 %v888, %v888
        %v893 = vpack.c.b16 %v889, %v889
        %v896 = vsel %vm869, %v822, %v890
        %v900 = vsel %vm869, %v823, %v891
        %v904 = vsel %vm869, %v824, %v892
        %v908 = vsel %vm869, %v825, %v893
        %910 = vset.pattern.permute.xlu0 0
        %911 = vperm.xlu0 %910, %v829
        %v912 = vpop.permute.xlu0 %911
        %v913 = vperm.slane %v912, %v837
        %vm914 = vcmask 1041409
        %v915 = vsel %vm914, %v849, %v848
        %v916 = vsel %vm851, %v850, %v915
        %v917 = vsel %vm853, %v913, %v916
        %918 = vrot.lane.b32.xlu0 %v856, 8
        %v919 = vpop.permute.xlu0 %918
        %vm920 = vcmask 64512
        %v921 = vsel %vm920, %v917, %v919
        %v923 = vsel %vm920, %v814, 0
        %v925 = vsel %vm920, %v872, 0
        %927 = vmatpush.bf16.xpose.msra.mxu0 0
        %928 = vmatpush.bf16.xpose.msra.mxu0 0
        %929 = vmatpush.bf16.xpose.msra.mxu0 0
        %930 = vmatpush.bf16.xpose.msra.mxu0 0
        %931 = vmatpush.bf16.xpose.msra.mxu0 0
        %932 = vmatpush.bf16.xpose.msra.mxu0 0
        %933 = vmatpush.bf16.xpose.msra.mxu0 0
        %934 = vmatpush.bf16.xpose.msra.mxu0 %v925
        %935 = vmatmul.bf16.gmra.mxu0 %v923
        %v936 = vpop.f32.mrf.mxu0
        %v937 = vadd.f32 0.0, %v936
        %v938 = vpop.f32.mrf.mxu0
        %939 = vdwg.mxu0
        %v941 = vsel %vm920, %v815, 0
        %v943 = vsel %vm920, %v875, 0
        %945 = vmatpush.bf16.xpose.msra.mxu0 0
        %946 = vmatpush.bf16.xpose.msra.mxu0 0
        %947 = vmatpush.bf16.xpose.msra.mxu0 0
        %948 = vmatpush.bf16.xpose.msra.mxu0 0
        %949 = vmatpush.bf16.xpose.msra.mxu0 0
        %950 = vmatpush.bf16.xpose.msra.mxu0 0
        %951 = vmatpush.bf16.xpose.msra.mxu0 0
        %952 = vmatpush.bf16.xpose.msra.mxu0 %v943
        %953 = vmatmul.bf16.gmra.mxu0 %v941
        %v954 = vpop.f32.mrf.mxu0
        %v955 = vadd.f32 0.0, %v954
        %v956 = vpop.f32.mrf.mxu0
        %957 = vdwg.mxu0
        %v959 = vsel %vm920, %v816, 0
        %v961 = vsel %vm920, %v878, 0
        %963 = vmatpush.bf16.xpose.msra.mxu0 0
        %964 = vmatpush.bf16.xpose.msra.mxu0 0
        %965 = vmatpush.bf16.xpose.msra.mxu0 0
        %966 = vmatpush.bf16.xpose.msra.mxu0 0
        %967 = vmatpush.bf16.xpose.msra.mxu0 0
        %968 = vmatpush.bf16.xpose.msra.mxu0 0
        %969 = vmatpush.bf16.xpose.msra.mxu0 0
        %970 = vmatpush.bf16.xpose.msra.mxu0 %v961
        %971 = vmatmul.bf16.gmra.mxu0 %v959
        %v972 = vpop.f32.mrf.mxu0
        %v973 = vadd.f32 0.0, %v972
        %v974 = vpop.f32.mrf.mxu0
        %975 = vdwg.mxu0
        %v977 = vsel %vm920, %v817, 0
        %v979 = vsel %vm920, %v881, 0
        %981 = vmatpush.bf16.xpose.msra.mxu0 0
        %982 = vmatpush.bf16.xpose.msra.mxu0 0
        %983 = vmatpush.bf16.xpose.msra.mxu0 0
        %984 = vmatpush.bf16.xpose.msra.mxu0 0
        %985 = vmatpush.bf16.xpose.msra.mxu0 0
        %986 = vmatpush.bf16.xpose.msra.mxu0 0
        %987 = vmatpush.bf16.xpose.msra.mxu0 0
        %988 = vmatpush.bf16.xpose.msra.mxu0 %v979
        %989 = vmatmul.bf16.gmra.mxu0 %v977
        %v990 = vpop.f32.mrf.mxu0
        %v991 = vadd.f32 0.0, %v990
        %v992 = vpop.f32.mrf.mxu0
        %993 = vdwg.mxu0
        %v994 = vrot.slane %v921, 1
        %v995 = vrot.slane %v921, 2
        %v996 = vrot.slane %v921, 3
        %v997 = vperm.slane %v921, 0
        %v998 = vperm.slane %v994, 0
        %v999 = vperm.slane %v995, 0
        %v1000 = vperm.slane %v996, 0
        %vm1001 = vcmp.eq.s32.totalorder %v841, %v997
        %vm1002 = vcmp.eq.s32.totalorder %v844, %v998
        %vm1003 = vcmp.eq.s32.totalorder %v847, %v999
        %vm1004 = vcmp.eq.s32.totalorder %v912, %v1000
        %v1005 = vsel %vm1001, -50000.0, %v937
        %v1006 = vsel %vm1002, -50000.0, %v955
        %v1007 = vsel %vm1003, -50000.0, %v973
        %v1008 = vsel %vm1004, -50000.0, %v991
        %vm1009 = vcmask 130048
        %v1010 = vsel %vm1009, %v1005, -inf
        %1011 = vmax.xlane.f32.xlu0 %v1010
        %v1012 = vpop.xlane.xlu0 %1011
        %v1013 = vsel %vm1009, %v1006, -inf
        %1014 = vmax.xlane.f32.xlu0 %v1013
        %v1015 = vpop.xlane.xlu0 %1014
        %v1016 = vsel %vm1009, %v1007, -inf
        %1017 = vmax.xlane.f32.xlu0 %v1016
        %v1018 = vpop.xlane.xlu0 %1017
        %v1019 = vsel %vm1009, %v1008, -inf
        %1020 = vmax.xlane.f32.xlu0 %v1019
        %v1021 = vpop.xlane.xlu0 %1020
        %v1022 = vsub.f32 %v1005, %v1012
        %v1023 = vsub.f32 %v1006, %v1015
        %v1024 = vsub.f32 %v1007, %v1018
        %v1025 = vsub.f32 %v1008, %v1021
        %v1026 = vmul.f32 %v1022, 1.442695
        %v1027 = vpow.pop %v1026
        %v1028 = vmul.f32 %v1023, 1.442695
        %v1029 = vpow.pop %v1028
        %v1030 = vmul.f32 %v1024, 1.442695
        %v1031 = vpow.pop %v1030
        %v1032 = vmul.f32 %v1025, 1.442695
        %v1033 = vpow.pop %v1032
        %v1034 = vsel %vm1009, %v1027, 0.0
        %1035 = vadd.xlane.f32.xlu0 %v1034
        %v1036 = vpop.xlane.xlu0 %1035
        %v1037 = vsel %vm1009, %v1029, 0.0
        %1038 = vadd.xlane.f32.xlu0 %v1037
        %v1039 = vpop.xlane.xlu0 %1038
        %v1040 = vsel %vm1009, %v1031, 0.0
        %1041 = vadd.xlane.f32.xlu0 %v1040
        %v1042 = vpop.xlane.xlu0 %1041
        %v1043 = vsel %vm1009, %v1033, 0.0
        %1044 = vadd.xlane.f32.xlu0 %v1043
        %v1045 = vpop.xlane.xlu0 %1044
        %v1046 = vrcp.pop %v1036
        %v1047 = vrcp.pop %v1039
        %v1048 = vrcp.pop %v1042
        %v1049 = vrcp.pop %v1045
        %v1050 = vmul.f32 %v1027, %v1046
        %v1051 = vmul.f32 %v1029, %v1047
        %v1052 = vmul.f32 %v1031, %v1048
        %v1053 = vmul.f32 %v1033, %v1049
        %v1054 = vlog2.pop %v1036
        %v1055 = vmul.f32 %v1054, 0.6931472
        %v1056 = vlog2.pop %v1039
        %v1057 = vmul.f32 %v1056, 0.6931472
        %v1058 = vlog2.pop %v1042
        %v1059 = vmul.f32 %v1058, 0.6931472
        %v1060 = vlog2.pop %v1045
        %v1061 = vmul.f32 %v1060, 0.6931472
        %v1062 = vadd.f32 %v1012, %v1055
        %v1063 = vadd.f32 %v1015, %v1057
        %v1064 = vadd.f32 %v1018, %v1059
        %v1065 = vadd.f32 %v1021, %v1061
        %v1066 = vpack.c.bf16 %v1050, %v1050
        %v1067 = vpack.c.bf16 %v1051, %v1051
        %v1068 = vpack.c.bf16 %v1052, %v1052
        %v1069 = vpack.c.bf16 %v1053, %v1053
        %v1071 = vsel %vm1009, %v1066, 0
        %1073 = vmatpush.bf16.msra.mxu0 0
        %1074 = vmatpush.bf16.msra.mxu0 0
        %1075 = vmatpush.bf16.msra.mxu0 0
        %1076 = vmatpush.bf16.msra.mxu0 0
        %1077 = vmatpush.bf16.msra.mxu0 0
        %1078 = vmatpush.bf16.msra.mxu0 0
        %1079 = vmatpush.bf16.msra.mxu0 0
        %1080 = vmatpush.bf16.msra.mxu0 %v896
        %1081 = vmatmul.bf16.gmra.mxu0 %v1071
        %v1082 = vpop.f32.mrf.mxu0
        %v1083 = vadd.f32 0.0, %v1082
        %v1084 = vpop.f32.mrf.mxu0
        %1085 = vdwg.mxu0
        %v1087 = vsel %vm1009, %v1067, 0
        %1089 = vmatpush.bf16.msra.mxu0 0
        %1090 = vmatpush.bf16.msra.mxu0 0
        %1091 = vmatpush.bf16.msra.mxu0 0
        %1092 = vmatpush.bf16.msra.mxu0 0
        %1093 = vmatpush.bf16.msra.mxu0 0
        %1094 = vmatpush.bf16.msra.mxu0 0
        %1095 = vmatpush.bf16.msra.mxu0 0
        %1096 = vmatpush.bf16.msra.mxu0 %v900
        %1097 = vmatmul.bf16.gmra.mxu0 %v1087
        %v1098 = vpop.f32.mrf.mxu0
        %v1099 = vadd.f32 0.0, %v1098
        %v1100 = vpop.f32.mrf.mxu0
        %1101 = vdwg.mxu0
        %v1103 = vsel %vm1009, %v1068, 0
        %1105 = vmatpush.bf16.msra.mxu0 0
        %1106 = vmatpush.bf16.msra.mxu0 0
        %1107 = vmatpush.bf16.msra.mxu0 0
        %1108 = vmatpush.bf16.msra.mxu0 0
        %1109 = vmatpush.bf16.msra.mxu0 0
        %1110 = vmatpush.bf16.msra.mxu0 0
        %1111 = vmatpush.bf16.msra.mxu0 0
        %1112 = vmatpush.bf16.msra.mxu0 %v904
        %1113 = vmatmul.bf16.gmra.mxu0 %v1103
        %v1114 = vpop.f32.mrf.mxu0
        %v1115 = vadd.f32 0.0, %v1114
        %v1116 = vpop.f32.mrf.mxu0
        %1117 = vdwg.mxu0
        %v1119 = vsel %vm1009, %v1069, 0
        %1121 = vmatpush.bf16.msra.mxu0 0
        %1122 = vmatpush.bf16.msra.mxu0 0
        %1123 = vmatpush.bf16.msra.mxu0 0
        %1124 = vmatpush.bf16.msra.mxu0 0
        %1125 = vmatpush.bf16.msra.mxu0 0
        %1126 = vmatpush.bf16.msra.mxu0 0
        %1127 = vmatpush.bf16.msra.mxu0 0
        %1128 = vmatpush.bf16.msra.mxu0 %v908
        %1129 = vmatmul.bf16.gmra.mxu0 %v1119
        %v1130 = vpop.f32.mrf.mxu0
        %v1131 = vadd.f32 0.0, %v1130
        %v1132 = vpop.f32.mrf.mxu0
        %1133 = vdwg.mxu0
        %1134 = vst.msk [vmem:[%s678] sm:$0xff] %vm920, %v1083
        %1135 = vst.msk [vmem:[%s678 + $0x8] sm:$0xff] %vm920, %v1099
        %1136 = vst.msk [vmem:[%s678 + $0x10] sm:$0xff] %vm920, %v1115
        %1137 = vst.msk [vmem:[%s678 + $0x18] sm:$0xff] %vm920, %v1131
        %v1142 = vperm.slane %v1062, %v837
        %v1143 = vperm.slane %v1063, %v837
        %v1144 = vperm.slane %v1064, %v837
        %v1145 = vperm.slane %v1065, %v837
        %v1146 = vsel %vm914, %v1143, %v1142
        %v1147 = vsel %vm851, %v1144, %v1146
        %v1148 = vsel %vm853, %v1145, %v1147
        %vm1150 = vcmask 60416
        %1151 = vst.msk [vmem:[%s685] sm:$0xf] %vm1150, %v1148
        %s1152 = sand.u32 %s331, 1
        %s1153 = scalar_lea.sflag [#allocation4], %s1152
        %s1154 = sand.u32 %s331, 1
        %s1155 = smul.addr %s1154, 32
        %s1156 = scalar_lea.vmem [#allocation5], %s1155
        %s1157 = sand.u32 %s359, 1
        %s1158 = scalar_lea.sflag [#allocation7], %s1157
        %s1159 = sand.u32 %s359, 1
        %s1160 = smul.addr %s1159, 4
        %s1161 = scalar_lea.vmem [#allocation6], %s1160
        // Predicated region
        $region53: #{tpu_custom_call.1} parent=47 // pred_check
          %p1162 = pneg %p341
        $region54: #{tpu_custom_call.1} parent=47 // pred_check_branch
          %1164 = sbr.rel (%p1162) target = $region56
        $region55: #{tpu_custom_call.1} parent=47 // pred_region
          %s1165 = smul.u32 4, %s34
          %1167 = vsyncadd %s1153, 0
          %s1168 = smul.addr %s33, 4
          %s1169 = sadd.s32 %s1165, %s1168
          %s1170 = smul.addr %s1169, 8
          %s1171 = scalar_lea.hbm %s7, %s1170
          %s1172 = sshll.u32 %s1156, 4
          %s1173 = int_to_ptr.vmem [resolvable:$true] %s1172
          %s1174 = sshll.u32 %s1171, 4
          %s1175 = int_to_ptr.hbm [resolvable:$true] %s1174
          %1180 = dma.vmem_to_hbm [thread:$0]  %s1173, 512, %s1175, %s1153, 128, 128, 8
        $region56: #{tpu_custom_call.1} parent=47 // pred_fallthru
          _
        // Predicated region
        $region57: #{tpu_custom_call.1} parent=47 // pred_check
          %p1181 = pneg %p369
        $region58: #{tpu_custom_call.1} parent=47 // pred_check_branch
          %1183 = sbr.rel (%p1181) target = $region60
        $region59: #{tpu_custom_call.1} parent=47 // pred_region
          %1185 = vsyncadd %s1158, 0
          %s1186 = sadd.s32 %s34, %s33
          %s1187 = smul.addr %s1186, 4
          %s1188 = scalar_lea.hbm %s8, %s1187
          %s1190 = sshll.u32 %s1161, 4
          %s1191 = int_to_ptr.vmem [resolvable:$true] %s1190
          %s1192 = sshll.u32 %s1188, 4
          %s1193 = int_to_ptr.hbm [resolvable:$true] %s1192
          %1195 = dma.vmem_to_hbm [thread:$0]  %s1191, 64, %s1193, %s1158
        $region60: #{tpu_custom_call.1} parent=47 // pred_fallthru
          _
      $region48: #{tpu_custom_call.1} parent=5 // pred_fallthru
        _
      %p1196 = scmp.le.s32.totalorder 2, %s24
      // Predicated region
      $region61: #{tpu_custom_call.1} parent=5 // pred_check
        %p1197 = pneg %p1196
      $region62: #{tpu_custom_call.1} parent=5 // pred_check_branch
        %1199 = sbr.rel (%p1197) target = $region64
      $region63: #{tpu_custom_call.1} parent=5 // pred_region
        %s1200 = ssub.s32 %s24, 2
        // Predicated region
        $region65: #{tpu_custom_call.1} parent=63 // pred_check
          %p1201 = pneg %p347
        $region66: #{tpu_custom_call.1} parent=63 // pred_check_branch
          %1203 = sbr.rel (%p1201) target = $region68
        $region67: #{tpu_custom_call.1} parent=63 // pred_region
          %s1204 = sand.u32 %s332, 1
          %s1205 = scalar_lea.sflag [#allocation4], %s1204
          %s1206 = sand.u32 %s332, 1
          %s1207 = smul.addr %s1206, 32
          %s1208 = scalar_lea.vmem [#allocation5], %s1207
          %1210 = dma.done %s1205, 512
        $region68: #{tpu_custom_call.1} parent=63 // pred_fallthru
          _
        // Predicated region
        $region69: #{tpu_custom_call.1} parent=63 // pred_check
          %p1211 = pneg %p375
        $region70: #{tpu_custom_call.1} parent=63 // pred_check_branch
          %1213 = sbr.rel (%p1211) target = $region72
        $region71: #{tpu_custom_call.1} parent=63 // pred_region
          %s1214 = sand.u32 %s360, 1
          %s1215 = scalar_lea.sflag [#allocation7], %s1214
          %s1216 = sand.u32 %s360, 1
          %s1217 = smul.addr %s1216, 4
          %s1218 = scalar_lea.vmem [#allocation6], %s1217
          %1220 = dma.done %s1215, 64
        $region72: #{tpu_custom_call.1} parent=63 // pred_fallthru
          _
      $region64: #{tpu_custom_call.1} parent=5 // pred_fallthru
        _
    $region6: #{tpu_custom_call.1} parent=1 // loop_footer
      %s28 = sadd.s32 1, %s24
    $region7: #{tpu_custom_call.1} parent=1 // loop_footer_branch
      %23 = sbr.rel target = $region3
    $region8: #{tpu_custom_call.1} parent=1 // loop_exit
      _
    %1221 = vsyncpa [#allocation3], 1
    %s1222 = scalar_lea.sflag [#allocation3], 1
    %1223 = vsyncpa %s1222, 1
    %1224 = vsyncpa [#allocation4], 1
    %s1225 = scalar_lea.sflag [#allocation4], 1
    %1226 = vsyncpa %s1225, 1
    %1227 = vsyncpa [#allocation7], 1
    %s1228 = scalar_lea.sflag [#allocation7], 1
    %1229 = vsyncpa %s1228, 1

</llo_original>
